<compile_context>
chip_gen: v5e
topology: v5e:2x2
jax: 0.10.0
libtpu: 0.0.40
codegen_flags: <defaults>
</compile_context>

<pallas_src>
import functools

import jax
import jax.numpy as jnp
from jax.experimental import pallas as pl
from jax.experimental.pallas import tpu as pltpu


def _fused_kernel(x_ref, w_ref, bc_ref, mask_ref, wf_ref, bf_ref,
                  conv_ref, fc_ref, *, H, W, Cin, Cout, K, B):
    """One grid step = B samples, batch laid along the lane axis."""
    HW = H * W
    L = B * HW

    x = x_ref[...]                                        # (Cin, L) bf16

    # ---- conv1: per-tap MXU dot -> XLU lane roll -> VPU validity mask ------
    # conv[co, q] = bias + sum_tap mask_tap[q] * (W_tap @ x)[co, q + d_tap]
    acc = None
    for t in range(K * K):
        kh, kw = t // K, t % K
        d = (kh - K // 2) * W + (kw - K // 2)             # flat source offset
        wt = w_ref[t * Cout:(t + 1) * Cout, :]            # (Cout, Cin), static
        y = jnp.dot(wt, x, preferred_element_type=jnp.float32)   # (Cout, L)
        if d != 0:
            y = pltpu.roll(y, (-d) % L, axis=1)           # y'[q] = y[q + d]
            y = y * mask_ref[t:t + 1, :]                  # zero-pad SAME conv
        acc = y if acc is None else acc + y
    acc = acc + bc_ref[...]                               # bias (lane bcast)
    conv_ref[...] = acc                                   # 'conv1' (pre-ReLU)

    # ---- relu1 + pool1: 2x2/2 max via 3 more lane rolls (VPU + XLU) --------
    # non-anchor lanes hold garbage but are never consumed (w_fused is zero
    # there), including any cross-sample / wrap-around positions.
    r = jnp.maximum(acc, 0.0)
    m = jnp.maximum(
        jnp.maximum(r, pltpu.roll(r, L - 1, axis=1)),
        jnp.maximum(pltpu.roll(r, L - W, axis=1),
                    pltpu.roll(r, L - W - 1, axis=1)))

    # ---- x.view(N,-1) + fc ---------------------------------------------------
    # Re-layout m (Cout, B*HW) [batch on lanes] -> (B, Cout*HW) [batch on
    # sublanes] with one per-channel reshape + a free lane-dim concat, then a
    # single MXU dot against the pool/flatten-fused fc weight.
    pieces = [m[c:c + 1, :].reshape(B, HW) for c in range(Cout)]
    flat = jnp.concatenate(pieces, axis=1)                # (B, Cout*HW)
    yfc = jnp.dot(flat, wf_ref[...],
                  preferred_element_type=jnp.float32) + bf_ref[...]
    fc_ref[0] = yfc                                       # (B, hidden)


def _pick_block_batch(N, cap=16):
    """Largest divisor of N <= cap that still leaves >= 2 grid steps."""
    best = 1
    for b in range(1, min(N, cap) + 1):
        if N % b == 0 and N // b >= 2:
            best = b
    return best


def feature_extractor(x_nchw, params, extracted_layers=("conv1", "fc")):
    N, Cin, H, W = x_nchw.shape
    Cout, _, KH, KW = params["conv1_w"].shape
    hidden, flat_dim = params["fc_w"].shape
    assert KH == KW == 3 and H % 2 == 0 and W % 2 == 0
    assert flat_dim == Cout * (H // 2) * (W // 2)
    HW = H * W
    K = KH

    B = _pick_block_batch(N)          # samples per grid step
    G = N // B                        # grid length (>= 2 whenever N >= 2)
    L = B * HW

    # ---- one-time layout plumbing / constant prep (plain XLA under jit) ----
    # batch on the lane axis: column index = sample*HW + i*W + j
    x_lanes = (x_nchw.reshape(N, Cin, HW).transpose(1, 0, 2)
               .reshape(Cin, N * HW).astype(jnp.bfloat16))
    # per-tap conv weights stacked along sublanes: rows [t*Cout:(t+1)*Cout]
    w_stack = (params["conv1_w"].transpose(2, 3, 0, 1)
               .reshape(KH * KW * Cout, Cin).astype(jnp.bfloat16))
    b_conv = params["conv1_b"].reshape(Cout, 1).astype(jnp.float32)

    # per-tap validity masks for the zero 'SAME' padding, periodic per sample
    q = jnp.arange(L, dtype=jnp.int32) % HW
    i, j = q // W, q % W
    rows = []
    for kh in range(KH):
        for kw in range(KW):
            dh, dw = kh - KH // 2, kw - KW // 2
            rows.append((i + dh >= 0) & (i + dh < H)
                        & (j + dw >= 0) & (j + dw < W))
    masks = jnp.stack(rows).astype(jnp.float32)           # (K*K, L)

    # fc weight with the 2x2 pool-anchor selection and the PyTorch NCHW
    # flatten (x.view(N,-1)) order folded in:
    #   w_fused[c*HW + q, h] = fc_w[h, c*Hp*Wp + p]   iff q == anchor(p)
    Hp, Wp = H // 2, W // 2
    p = jnp.arange(Hp * Wp)
    anchors = 2 * (p // Wp) * W + 2 * (p % Wp)
    wfc = params["fc_w"].T.reshape(Cout, Hp * Wp, hidden).astype(jnp.float32)
    w_fused = (jnp.zeros((Cout, HW, hidden), jnp.float32)
               .at[:, anchors, :].set(wfc).reshape(Cout * HW, hidden))
    b_fc = params["fc_b"].reshape(1, hidden).astype(jnp.float32)

    kern = functools.partial(_fused_kernel, H=H, W=W, Cin=Cin, Cout=Cout,
                             K=K, B=B)
    conv_flat, fc_out = pl.pallas_call(
        kern,
        grid=(G,),
        in_specs=[
            pl.BlockSpec((Cin, L), lambda n: (0, n)),
            # grid-invariant index_maps: blocks below are fetched once and
            # stay resident across the whole grid.
            pl.BlockSpec((KH * KW * Cout, Cin), lambda n: (0, 0)),
            pl.BlockSpec((Cout, 1), lambda n: (0, 0)),
            pl.BlockSpec((KH * KW, L), lambda n: (0, 0)),
            pl.BlockSpec((Cout * HW, hidden), lambda n: (0, 0)),
            pl.BlockSpec((1, hidden), lambda n: (0, 0)),
        ],
        out_specs=(
            pl.BlockSpec((Cout, L), lambda n: (0, n)),
            pl.BlockSpec((1, B, hidden), lambda n: (n, 0, 0)),
        ),
        out_shape=(
            jax.ShapeDtypeStruct((Cout, N * HW), jnp.float32),
            jax.ShapeDtypeStruct((G, B, hidden), jnp.float32),
        ),
        compiler_params=pltpu.CompilerParams(dimension_semantics=("parallel",)),
    )(x_lanes, w_stack, b_conv, masks, w_fused, b_fc)

    conv1 = (conv_flat.reshape(Cout, N, HW).transpose(1, 0, 2)
             .reshape(N, Cout, H, W))                     # NCHW, pre-ReLU
    fc = fc_out.reshape(N, hidden)

    outputs = []
    # submodule registration order: conv1 -> relu1 -> pool1 -> fc
    if "conv1" in extracted_layers:
        outputs.append(conv1)
    if "relu1" in extracted_layers:                       # cheap derived view
        outputs.append(jnp.maximum(conv1, 0.0))
    if "pool1" in extracted_layers:
        r = jnp.maximum(conv1, 0.0)
        outputs.append(jnp.max(r.reshape(N, Cout, H // 2, 2, W // 2, 2),
                               axis=(3, 5)))
    if "fc" in extracted_layers:
        outputs.append(fc)
    return outputs


def _reference(x, params):
    """Pure-JAX reference of the wrapped submodule (self-check only)."""
    conv = jax.lax.conv_general_dilated(
        x, params["conv1_w"], window_strides=(1, 1), padding="SAME",
        dimension_numbers=("NCHW", "OIHW", "NCHW"),
        precision=jax.lax.Precision.HIGHEST)
    conv = conv + params["conv1_b"][None, :, None, None]
    r = jnp.maximum(conv, 0.0)
    N, C, H, W = r.shape
    p = jnp.max(r.reshape(N, C, H // 2, 2, W // 2, 2), axis=(3, 5))
    flat = p.reshape(N, -1)
    fc = jnp.dot(flat, params["fc_w"].T,
                 precision=jax.lax.Precision.HIGHEST) + params["fc_b"]
    return conv, fc


if __name__ == "__main__":
    key = jax.random.PRNGKey(0)
    k1, k2, k3, k4, k5 = jax.random.split(key, 5)

    N, Cin, H, W = 2, 4, 16, 16
    Cout, hidden = 8, 32
    flat = Cout * (H // 2) * (W // 2)

    x = jax.random.normal(k1, (N, Cin, H, W), jnp.float32)
    params = {
        "conv1_w": jax.random.normal(k2, (Cout, Cin, 3, 3), jnp.float32) * 0.1,
        "conv1_b": jax.random.normal(k3, (Cout,), jnp.float32) * 0.1,
        "fc_w":    jax.random.normal(k4, (hidden, flat), jnp.float32) * 0.05,
        "fc_b":    jax.random.normal(k5, (hidden,), jnp.float32) * 0.05,
    }

    fwd = jax.jit(lambda xx, pp: feature_extractor(xx, pp, ("conv1", "fc")))
    outs = jax.block_until_ready(fwd(x, params))

    assert outs[0].shape == (N, Cout, H, W)   # conv1 feature map (NCHW, pre-ReLU)
    assert outs[1].shape == (N, hidden)       # fc feature

    ref_conv, ref_fc = _reference(x, params)
    # tolerance 2e-2 accommodates the bf16 cast of x / conv weights (f32 accum)
    assert jnp.allclose(outs[0], ref_conv, atol=2e-2, rtol=2e-2)
    assert jnp.allclose(outs[1], ref_fc, atol=2e-2, rtol=2e-2)

    print("KERNEL_OK")
</pallas_src>

<mosaic_0001>
module attributes {stable_mosaic.version = 11 : i64} {
  func.func @_fused_kernel(%arg0: i32, %arg1: memref<4x256xbf16, #tpu.memory_space<vmem>>, %arg2: memref<72x4xbf16, #tpu.memory_space<vmem>>, %arg3: memref<8x1xf32, #tpu.memory_space<vmem>>, %arg4: memref<9x256xf32, #tpu.memory_space<vmem>>, %arg5: memref<2048x32xf32, #tpu.memory_space<vmem>>, %arg6: memref<1x32xf32, #tpu.memory_space<vmem>>, %arg7: memref<8x256xf32, #tpu.memory_space<vmem>>, %arg8: memref<1x1x32xf32, #tpu.memory_space<vmem>>) attributes {dimension_semantics = [#tpu.dimension_semantics<parallel>], iteration_bounds = array<i64: 2>, scalar_prefetch = 0 : i64, scratch_operands = 0 : i64, tpu.core_type = #tpu.core_type<tc>, window_params = [{transform_indices = @transform_0, window_bounds = array<i64: 4, 256>}, {pipeline_mode = #tpu.pipeline_mode<synchronous>, transform_indices = @transform_1, window_bounds = array<i64: 72, 4>}, {pipeline_mode = #tpu.pipeline_mode<synchronous>, transform_indices = @transform_2, window_bounds = array<i64: 8, 1>}, {pipeline_mode = #tpu.pipeline_mode<synchronous>, transform_indices = @transform_3, window_bounds = array<i64: 9, 256>}, {pipeline_mode = #tpu.pipeline_mode<synchronous>, transform_indices = @transform_4, window_bounds = array<i64: 2048, 32>}, {pipeline_mode = #tpu.pipeline_mode<synchronous>, transform_indices = @transform_5, window_bounds = array<i64: 1, 32>}, {transform_indices = @transform_6, window_bounds = array<i64: 8, 256>}, {transform_indices = @transform_7, window_bounds = array<i64: 1, 1, 32>}]} {
    %c0 = arith.constant 0 : index
    %c0_0 = arith.constant 0 : index
    %0 = vector.load %arg1[%c0, %c0_0] : memref<4x256xbf16, #tpu.memory_space<vmem>>, vector<4x256xbf16>
    %c0_1 = arith.constant 0 : index
    %c0_2 = arith.constant 0 : index
    %1 = vector.load %arg2[%c0_1, %c0_2] : memref<72x4xbf16, #tpu.memory_space<vmem>>, vector<8x4xbf16>
    %cst = arith.constant dense<0.000000e+00> : vector<8x256xf32>
    %2 = tpu.matmul %1, %0, %cst {dimension_numbers = #tpu.dot_dimension_numbers<[1], [0], [0], [1], [0, 0, 1, 1], [], []>} : vector<8x4xbf16>, vector<4x256xbf16>, vector<8x256xf32> -> vector<8x256xf32>
    %c17_i32 = arith.constant 17 : i32
    %3 = tpu.dynamic_rotate %2 by %c17_i32 dim 1 : vector<8x256xf32>, i32 -> vector<8x256xf32>
    %c0_3 = arith.constant 0 : index
    %c0_4 = arith.constant 0 : index
    %4 = vector.load %arg4[%c0_3, %c0_4] : memref<9x256xf32, #tpu.memory_space<vmem>>, vector<1x256xf32>
    %5 = vector.broadcast %4 : vector<1x256xf32> to vector<8x256xf32>
    %6 = arith.mulf %3, %5 : vector<8x256xf32>
    %c8 = arith.constant 8 : index
    %c0_5 = arith.constant 0 : index
    %7 = vector.load %arg2[%c8, %c0_5] : memref<72x4xbf16, #tpu.memory_space<vmem>>, vector<8x4xbf16>
    %cst_6 = arith.constant dense<0.000000e+00> : vector<8x256xf32>
    %8 = tpu.matmul %7, %0, %cst_6 {dimension_numbers = #tpu.dot_dimension_numbers<[1], [0], [0], [1], [0, 0, 1, 1], [], []>} : vector<8x4xbf16>, vector<4x256xbf16>, vector<8x256xf32> -> vector<8x256xf32>
    %c16_i32 = arith.constant 16 : i32
    %9 = tpu.dynamic_rotate %8 by %c16_i32 dim 1 : vector<8x256xf32>, i32 -> vector<8x256xf32>
    %c1 = arith.constant 1 : index
    %c0_7 = arith.constant 0 : index
    %10 = vector.load %arg4[%c1, %c0_7] : memref<9x256xf32, #tpu.memory_space<vmem>>, vector<1x256xf32>
    %11 = vector.broadcast %10 : vector<1x256xf32> to vector<8x256xf32>
    %12 = arith.mulf %9, %11 : vector<8x256xf32>
    %13 = arith.addf %6, %12 : vector<8x256xf32>
    %c16 = arith.constant 16 : index
    %c0_8 = arith.constant 0 : index
    %14 = vector.load %arg2[%c16, %c0_8] : memref<72x4xbf16, #tpu.memory_space<vmem>>, vector<8x4xbf16>
    %cst_9 = arith.constant dense<0.000000e+00> : vector<8x256xf32>
    %15 = tpu.matmul %14, %0, %cst_9 {dimension_numbers = #tpu.dot_dimension_numbers<[1], [0], [0], [1], [0, 0, 1, 1], [], []>} : vector<8x4xbf16>, vector<4x256xbf16>, vector<8x256xf32> -> vector<8x256xf32>
    %c15_i32 = arith.constant 15 : i32
    %16 = tpu.dynamic_rotate %15 by %c15_i32 dim 1 : vector<8x256xf32>, i32 -> vector<8x256xf32>
    %c2 = arith.constant 2 : index
    %c0_10 = arith.constant 0 : index
    %17 = vector.load %arg4[%c2, %c0_10] : memref<9x256xf32, #tpu.memory_space<vmem>>, vector<1x256xf32>
    %18 = vector.broadcast %17 : vector<1x256xf32> to vector<8x256xf32>
    %19 = arith.mulf %16, %18 : vector<8x256xf32>
    %20 = arith.addf %13, %19 : vector<8x256xf32>
    %c24 = arith.constant 24 : index
    %c0_11 = arith.constant 0 : index
    %21 = vector.load %arg2[%c24, %c0_11] : memref<72x4xbf16, #tpu.memory_space<vmem>>, vector<8x4xbf16>
    %cst_12 = arith.constant dense<0.000000e+00> : vector<8x256xf32>
    %22 = tpu.matmul %21, %0, %cst_12 {dimension_numbers = #tpu.dot_dimension_numbers<[1], [0], [0], [1], [0, 0, 1, 1], [], []>} : vector<8x4xbf16>, vector<4x256xbf16>, vector<8x256xf32> -> vector<8x256xf32>
    %c1_i32 = arith.constant 1 : i32
    %23 = tpu.dynamic_rotate %22 by %c1_i32 dim 1 : vector<8x256xf32>, i32 -> vector<8x256xf32>
    %c3 = arith.constant 3 : index
    %c0_13 = arith.constant 0 : index
    %24 = vector.load %arg4[%c3, %c0_13] : memref<9x256xf32, #tpu.memory_space<vmem>>, vector<1x256xf32>
    %25 = vector.broadcast %24 : vector<1x256xf32> to vector<8x256xf32>
    %26 = arith.mulf %23, %25 : vector<8x256xf32>
    %27 = arith.addf %20, %26 : vector<8x256xf32>
    %c32 = arith.constant 32 : index
    %c0_14 = arith.constant 0 : index
    %28 = vector.load %arg2[%c32, %c0_14] : memref<72x4xbf16, #tpu.memory_space<vmem>>, vector<8x4xbf16>
    %cst_15 = arith.constant dense<0.000000e+00> : vector<8x256xf32>
    %29 = tpu.matmul %28, %0, %cst_15 {dimension_numbers = #tpu.dot_dimension_numbers<[1], [0], [0], [1], [0, 0, 1, 1], [], []>} : vector<8x4xbf16>, vector<4x256xbf16>, vector<8x256xf32> -> vector<8x256xf32>
    %30 = arith.addf %27, %29 : vector<8x256xf32>
    %c40 = arith.constant 40 : index
    %c0_16 = arith.constant 0 : index
    %31 = vector.load %arg2[%c40, %c0_16] : memref<72x4xbf16, #tpu.memory_space<vmem>>, vector<8x4xbf16>
    %cst_17 = arith.constant dense<0.000000e+00> : vector<8x256xf32>
    %32 = tpu.matmul %31, %0, %cst_17 {dimension_numbers = #tpu.dot_dimension_numbers<[1], [0], [0], [1], [0, 0, 1, 1], [], []>} : vector<8x4xbf16>, vector<4x256xbf16>, vector<8x256xf32> -> vector<8x256xf32>
    %c255_i32 = arith.constant 255 : i32
    %33 = tpu.dynamic_rotate %32 by %c255_i32 dim 1 : vector<8x256xf32>, i32 -> vector<8x256xf32>
    %c5 = arith.constant 5 : index
    %c0_18 = arith.constant 0 : index
    %34 = vector.load %arg4[%c5, %c0_18] : memref<9x256xf32, #tpu.memory_space<vmem>>, vector<1x256xf32>
    %35 = vector.broadcast %34 : vector<1x256xf32> to vector<8x256xf32>
    %36 = arith.mulf %33, %35 : vector<8x256xf32>
    %37 = arith.addf %30, %36 : vector<8x256xf32>
    %c48 = arith.constant 48 : index
    %c0_19 = arith.constant 0 : index
    %38 = vector.load %arg2[%c48, %c0_19] : memref<72x4xbf16, #tpu.memory_space<vmem>>, vector<8x4xbf16>
    %cst_20 = arith.constant dense<0.000000e+00> : vector<8x256xf32>
    %39 = tpu.matmul %38, %0, %cst_20 {dimension_numbers = #tpu.dot_dimension_numbers<[1], [0], [0], [1], [0, 0, 1, 1], [], []>} : vector<8x4xbf16>, vector<4x256xbf16>, vector<8x256xf32> -> vector<8x256xf32>
    %c241_i32 = arith.constant 241 : i32
    %40 = tpu.dynamic_rotate %39 by %c241_i32 dim 1 : vector<8x256xf32>, i32 -> vector<8x256xf32>
    %c6 = arith.constant 6 : index
    %c0_21 = arith.constant 0 : index
    %41 = vector.load %arg4[%c6, %c0_21] : memref<9x256xf32, #tpu.memory_space<vmem>>, vector<1x256xf32>
    %42 = vector.broadcast %41 : vector<1x256xf32> to vector<8x256xf32>
    %43 = arith.mulf %40, %42 : vector<8x256xf32>
    %44 = arith.addf %37, %43 : vector<8x256xf32>
    %c56 = arith.constant 56 : index
    %c0_22 = arith.constant 0 : index
    %45 = vector.load %arg2[%c56, %c0_22] : memref<72x4xbf16, #tpu.memory_space<vmem>>, vector<8x4xbf16>
    %cst_23 = arith.constant dense<0.000000e+00> : vector<8x256xf32>
    %46 = tpu.matmul %45, %0, %cst_23 {dimension_numbers = #tpu.dot_dimension_numbers<[1], [0], [0], [1], [0, 0, 1, 1], [], []>} : vector<8x4xbf16>, vector<4x256xbf16>, vector<8x256xf32> -> vector<8x256xf32>
    %c240_i32 = arith.constant 240 : i32
    %47 = tpu.dynamic_rotate %46 by %c240_i32 dim 1 : vector<8x256xf32>, i32 -> vector<8x256xf32>
    %c7 = arith.constant 7 : index
    %c0_24 = arith.constant 0 : index
    %48 = vector.load %arg4[%c7, %c0_24] : memref<9x256xf32, #tpu.memory_space<vmem>>, vector<1x256xf32>
    %49 = vector.broadcast %48 : vector<1x256xf32> to vector<8x256xf32>
    %50 = arith.mulf %47, %49 : vector<8x256xf32>
    %51 = arith.addf %44, %50 : vector<8x256xf32>
    %c64 = arith.constant 64 : index
    %c0_25 = arith.constant 0 : index
    %52 = vector.load %arg2[%c64, %c0_25] : memref<72x4xbf16, #tpu.memory_space<vmem>>, vector<8x4xbf16>
    %cst_26 = arith.constant dense<0.000000e+00> : vector<8x256xf32>
    %53 = tpu.matmul %52, %0, %cst_26 {dimension_numbers = #tpu.dot_dimension_numbers<[1], [0], [0], [1], [0, 0, 1, 1], [], []>} : vector<8x4xbf16>, vector<4x256xbf16>, vector<8x256xf32> -> vector<8x256xf32>
    %c239_i32 = arith.constant 239 : i32
    %54 = tpu.dynamic_rotate %53 by %c239_i32 dim 1 : vector<8x256xf32>, i32 -> vector<8x256xf32>
    %c8_27 = arith.constant 8 : index
    %c0_28 = arith.constant 0 : index
    %55 = vector.load %arg4[%c8_27, %c0_28] : memref<9x256xf32, #tpu.memory_space<vmem>>, vector<1x256xf32>
    %56 = vector.broadcast %55 : vector<1x256xf32> to vector<8x256xf32>
    %57 = arith.mulf %54, %56 : vector<8x256xf32>
    %58 = arith.addf %51, %57 : vector<8x256xf32>
    %c0_29 = arith.constant 0 : index
    %c0_30 = arith.constant 0 : index
    %59 = vector.load %arg3[%c0_29, %c0_30] : memref<8x1xf32, #tpu.memory_space<vmem>>, vector<8x1xf32>
    %60 = vector.broadcast %59 : vector<8x1xf32> to vector<8x256xf32>
    %61 = arith.addf %58, %60 : vector<8x256xf32>
    %c0_31 = arith.constant 0 : index
    %c0_32 = arith.constant 0 : index
    %62 = vector.load %arg7[%c0_31, %c0_32] : memref<8x256xf32, #tpu.memory_space<vmem>>, vector<8x256xf32>
    tpu.vector_store %arg7[%c0_31, %c0_32], %61 {strides = array<i32>} : memref<8x256xf32, #tpu.memory_space<vmem>>, vector<8x256xf32>,
    %cst_33 = arith.constant 0.000000e+00 : f32
    %63 = vector.broadcast %cst_33 : f32 to vector<8x256xf32>
    %64 = arith.maximumf %61, %63 : vector<8x256xf32>
    %c255_i32_34 = arith.constant 255 : i32
    %65 = tpu.dynamic_rotate %64 by %c255_i32_34 dim 1 : vector<8x256xf32>, i32 -> vector<8x256xf32>
    %66 = arith.maximumf %64, %65 : vector<8x256xf32>
    %c240_i32_35 = arith.constant 240 : i32
    %67 = tpu.dynamic_rotate %64 by %c240_i32_35 dim 1 : vector<8x256xf32>, i32 -> vector<8x256xf32>
    %c239_i32_36 = arith.constant 239 : i32
    %68 = tpu.dynamic_rotate %64 by %c239_i32_36 dim 1 : vector<8x256xf32>, i32 -> vector<8x256xf32>
    %69 = arith.maximumf %67, %68 : vector<8x256xf32>
    %70 = arith.maximumf %66, %69 : vector<8x256xf32>
    %71 = vector.extract_strided_slice %70 {offsets = [0, 0], sizes = [1, 256], strides = [1, 1]} : vector<8x256xf32> to vector<1x256xf32>
    %72 = vector.extract_strided_slice %70 {offsets = [1, 0], sizes = [1, 256], strides = [1, 1]} : vector<8x256xf32> to vector<1x256xf32>
    %73 = vector.extract_strided_slice %70 {offsets = [2, 0], sizes = [1, 256], strides = [1, 1]} : vector<8x256xf32> to vector<1x256xf32>
    %74 = vector.extract_strided_slice %70 {offsets = [3, 0], sizes = [1, 256], strides = [1, 1]} : vector<8x256xf32> to vector<1x256xf32>
    %75 = vector.extract_strided_slice %70 {offsets = [4, 0], sizes = [1, 256], strides = [1, 1]} : vector<8x256xf32> to vector<1x256xf32>
    %76 = vector.extract_strided_slice %70 {offsets = [5, 0], sizes = [1, 256], strides = [1, 1]} : vector<8x256xf32> to vector<1x256xf32>
    %77 = vector.extract_strided_slice %70 {offsets = [6, 0], sizes = [1, 256], strides = [1, 1]} : vector<8x256xf32> to vector<1x256xf32>
    %78 = vector.extract_strided_slice %70 {offsets = [7, 0], sizes = [1, 256], strides = [1, 1]} : vector<8x256xf32> to vector<1x256xf32>
    %79 = tpu.concatenate %71, %72, %73, %74, %75, %76, %77, %78 in 1 : vector<1x256xf32>, vector<1x256xf32>, vector<1x256xf32>, vector<1x256xf32>, vector<1x256xf32>, vector<1x256xf32>, vector<1x256xf32>, vector<1x256xf32> -> vector<1x2048xf32>
    %c0_37 = arith.constant 0 : index
    %c0_38 = arith.constant 0 : index
    %80 = vector.load %arg5[%c0_37, %c0_38] : memref<2048x32xf32, #tpu.memory_space<vmem>>, vector<2048x32xf32>
    %cst_39 = arith.constant dense<0.000000e+00> : vector<1x32xf32>
    %81 = tpu.matmul %79, %80, %cst_39 {dimension_numbers = #tpu.dot_dimension_numbers<[1], [0], [0], [1], [0, 0, 1, 1], [], []>} : vector<1x2048xf32>, vector<2048x32xf32>, vector<1x32xf32> -> vector<1x32xf32>
    %c0_40 = arith.constant 0 : index
    %c0_41 = arith.constant 0 : index
    %82 = vector.load %arg6[%c0_40, %c0_41] : memref<1x32xf32, #tpu.memory_space<vmem>>, vector<1x32xf32>
    %83 = arith.addf %81, %82 : vector<1x32xf32>
    %c0_42 = arith.constant 0 : index
    %c0_43 = arith.constant 0 : index
    %c0_44 = arith.constant 0 : index
    %84 = vector.load %arg8[%c0_42, %c0_43, %c0_44] : memref<1x1x32xf32, #tpu.memory_space<vmem>>, vector<1x1x32xf32>
    %85 = vector.shape_cast %84 : vector<1x1x32xf32> to vector<1x32xf32>
    %86 = vector.shape_cast %83 : vector<1x32xf32> to vector<1x1x32xf32>
    tpu.vector_store %arg8[%c0_42, %c0_43, %c0_44], %86 {strides = array<i32>} : memref<1x1x32xf32, #tpu.memory_space<vmem>>, vector<1x1x32xf32>,
    return
  }
  func.func @transform_0(%arg0: i32) -> (i32, i32) {
    %c0_i32 = arith.constant 0 : i32
    %c0_i32_0 = arith.constant 0 : i32
    return %c0_i32, %arg0 : i32, i32
  }
  func.func @transform_1(%arg0: i32) -> (i32, i32) {
    %c0_i32 = arith.constant 0 : i32
    %c0_i32_0 = arith.constant 0 : i32
    %c0_i32_1 = arith.constant 0 : i32
    return %c0_i32, %c0_i32_0 : i32, i32
  }
  func.func @transform_2(%arg0: i32) -> (i32, i32) {
    %c0_i32 = arith.constant 0 : i32
    %c0_i32_0 = arith.constant 0 : i32
    %c0_i32_1 = arith.constant 0 : i32
    return %c0_i32, %c0_i32_0 : i32, i32
  }
  func.func @transform_3(%arg0: i32) -> (i32, i32) {
    %c0_i32 = arith.constant 0 : i32
    %c0_i32_0 = arith.constant 0 : i32
    %c0_i32_1 = arith.constant 0 : i32
    return %c0_i32, %c0_i32_0 : i32, i32
  }
  func.func @transform_4(%arg0: i32) -> (i32, i32) {
    %c0_i32 = arith.constant 0 : i32
    %c0_i32_0 = arith.constant 0 : i32
    %c0_i32_1 = arith.constant 0 : i32
    return %c0_i32, %c0_i32_0 : i32, i32
  }
  func.func @transform_5(%arg0: i32) -> (i32, i32) {
    %c0_i32 = arith.constant 0 : i32
    %c0_i32_0 = arith.constant 0 : i32
    %c0_i32_1 = arith.constant 0 : i32
    return %c0_i32, %c0_i32_0 : i32, i32
  }
  func.func @transform_6(%arg0: i32) -> (i32, i32) {
    %c0_i32 = arith.constant 0 : i32
    %c0_i32_0 = arith.constant 0 : i32
    return %c0_i32, %arg0 : i32, i32
  }
  func.func @transform_7(%arg0: i32) -> (i32, i32, i32) {
    %c0_i32 = arith.constant 0 : i32
    %c0_i32_0 = arith.constant 0 : i32
    %c0_i32_1 = arith.constant 0 : i32
    return %arg0, %c0_i32, %c0_i32_0 : i32, i32, i32
  }
}

</mosaic_0001>

<llo_original>
// kernel: _lambda_.1
$region0: #{_lambda_.1}
  #allocation0 [shape = 'u32[]', space=smem, size = 0x4, offset = 0x4, fixed_abs, tag = 'smem constant byte address 0x4 - core index']
  #allocation1 [shape = 'u32[72,128]{1,0:T(1,128)}', space=vmem, size = 0x9000, scoped, tag = 'internal scratch']
  %s0 = inlined_call_operand.vmem [shape: bf16[4,512], index: 0, kind: input, shape index: {}]
  %s1 = inlined_call_operand.vmem [shape: bf16[72,4], index: 1, kind: input, shape index: {}]
  %s2 = inlined_call_operand.vmem [shape: f32[8,1], index: 2, kind: input, shape index: {}]
  %s3 = inlined_call_operand.vmem [shape: f32[9,256], index: 3, kind: input, shape index: {}]
  %s4 = inlined_call_operand.vmem [shape: f32[2048,32], index: 4, kind: input, shape index: {}]
  %s5 = inlined_call_operand.vmem [shape: f32[1,32], index: 5, kind: input, shape index: {}]
  %s6 = inlined_call_operand.vmem [shape: f32[8,512], index: 6, kind: output, shape index: {0}]
  %s7 = inlined_call_operand.hbm [shape: f32[2,1,32], index: 7, kind: output, shape index: {1}]
  %8 = xla_tuple %s6, %s7
  %s9 = sld [smem:[#allocation0]]
  $region65: #{_lambda_.1} parent=0
    _
  %s11 = ssub.s32 1, %s9
  %s12 = scalar_select 0, %s11, %s9
  $region1: #{_lambda_.1} parent=0
    #allocation2 [shape = 'u8[1024]{0}', space=vmem, size = 0x400, scoped, tag = 'output window, operand 1']
    #allocation3 [shape = 's32[2]{0}', space=sflag, size = 0x8, scoped, tag = 'scoped memory for _lambda_.1']
    %13 = vsyncpa [#allocation3], 0
    %s14 = scalar_lea.sflag [#allocation3], 1
    %15 = vsyncpa %s14, 0
    loop: start=0, step=1, limit=4
    $region2: #{_lambda_.1} parent=1 // loop_pre_header
      _
    $region3: #{_lambda_.1} parent=1 // loop_header
      %s17 = sphi 0, %s21
      %p18 = scmp.ge.s32.totalorder %s17, 4
      %s27 = sphi 0, %s29
      %s30 = sphi 0, %s27
      %s31 = sphi 0, %s30
      %s47 = sphi 0, %s31
      %s51 = sphi 0, %s51
      %s53 = sphi 0, %s51
      %s54 = sphi 0, %s53
      %s68 = sphi 0, %s54
      %s72 = sphi 0, %s72
      %s74 = sphi 0, %s72
      %s75 = sphi 0, %s74
      %s89 = sphi 0, %s75
      %s93 = sphi 0, %s93
      %s95 = sphi 0, %s93
      %s96 = sphi 0, %s95
      %s110 = sphi 0, %s96
      %s114 = sphi 0, %s114
      %s116 = sphi 0, %s114
      %s117 = sphi 0, %s116
      %s131 = sphi 0, %s117
      %s135 = sphi 0, %s135
      %s137 = sphi 0, %s135
      %s138 = sphi 0, %s137
      %s152 = sphi 0, %s138
      %s158 = sphi 0, %s160
      %s161 = sphi 0, %s158
      %s162 = sphi 0, %s161
      %s178 = sphi 0, %s162
      %s184 = sphi 0, %s186
      %s187 = sphi 0, %s184
      %s188 = sphi 0, %s187
      %s204 = sphi 0, %s188
    $region4: #{_lambda_.1} parent=1 // loop_header_branch
      %20 = sbr.rel (%p18) target = $region8
    $region5: #{_lambda_.1} parent=1 // loop_body
      %s22 = ssub.s32 %s17, 1
      %s23 = ssub.s32 %s17, 2
      %s24 = sadd.s32 %s17, 1
      %s25 = ssub.s32 %s17, %s24
      %p26 = scmp.eq.s32.totalorder %s25, 0
      %s28 = sadd.s32 %s27, 1
      %s29 = scalar_select %p26, %s27, %s28
      %p32 = pneg %p26
      %p33 = scmp.eq.s32.totalorder %s17, 1
      %p34 = por %p32, %p33
      %p35 = scmp.ne.s32.totalorder %s27, %s30
      %p36 = scmp.eq.s32.totalorder %s17, 0
      %p37 = por %p35, %p36
      %p38 = scmp.ne.s32.totalorder %s27, %s30
      %p39 = scmp.eq.s32.totalorder %s22, 1
      %p40 = por %p38, %p39
      %p41 = scmp.ne.s32.totalorder %s30, %s31
      %p42 = scmp.eq.s32.totalorder %s22, 0
      %p43 = por %p41, %p42
      %p44 = scmp.ne.s32.totalorder %s30, %s31
      %p45 = scmp.eq.s32.totalorder %s23, 1
      %p46 = por %p44, %p45
      %p48 = scmp.ne.s32.totalorder %s31, %s47
      %p49 = scmp.eq.s32.totalorder %s23, 0
      %p50 = por %p48, %p49
      %s52 = sadd.s32 %s51, 1
      %p55 = scmp.eq.s32.totalorder %s17, 1
      %p56 = scmp.ne.s32.totalorder %s51, %s53
      %p57 = scmp.eq.s32.totalorder %s17, 0
      %p58 = por %p56, %p57
      %p59 = scmp.ne.s32.totalorder %s51, %s53
      %p60 = scmp.eq.s32.totalorder %s22, 1
      %p61 = por %p59, %p60
      %p62 = scmp.ne.s32.totalorder %s53, %s54
      %p63 = scmp.eq.s32.totalorder %s22, 0
      %p64 = por %p62, %p63
      %p65 = scmp.ne.s32.totalorder %s53, %s54
      %p66 = scmp.eq.s32.totalorder %s23, 1
      %p67 = por %p65, %p66
      %p69 = scmp.ne.s32.totalorder %s54, %s68
      %p70 = scmp.eq.s32.totalorder %s23, 0
      %p71 = por %p69, %p70
      %s73 = sadd.s32 %s72, 1
      %p76 = scmp.eq.s32.totalorder %s17, 1
      %p77 = scmp.ne.s32.totalorder %s72, %s74
      %p78 = scmp.eq.s32.totalorder %s17, 0
      %p79 = por %p77, %p78
      %p80 = scmp.ne.s32.totalorder %s72, %s74
      %p81 = scmp.eq.s32.totalorder %s22, 1
      %p82 = por %p80, %p81
      %p83 = scmp.ne.s32.totalorder %s74, %s75
      %p84 = scmp.eq.s32.totalorder %s22, 0
      %p85 = por %p83, %p84
      %p86 = scmp.ne.s32.totalorder %s74, %s75
      %p87 = scmp.eq.s32.totalorder %s23, 1
      %p88 = por %p86, %p87
      %p90 = scmp.ne.s32.totalorder %s75, %s89
      %p91 = scmp.eq.s32.totalorder %s23, 0
      %p92 = por %p90, %p91
      %s94 = sadd.s32 %s93, 1
      %p97 = scmp.eq.s32.totalorder %s17, 1
      %p98 = scmp.ne.s32.totalorder %s93, %s95
      %p99 = scmp.eq.s32.totalorder %s17, 0
      %p100 = por %p98, %p99
      %p101 = scmp.ne.s32.totalorder %s93, %s95
      %p102 = scmp.eq.s32.totalorder %s22, 1
      %p103 = por %p101, %p102
      %p104 = scmp.ne.s32.totalorder %s95, %s96
      %p105 = scmp.eq.s32.totalorder %s22, 0
      %p106 = por %p104, %p105
      %p107 = scmp.ne.s32.totalorder %s95, %s96
      %p108 = scmp.eq.s32.totalorder %s23, 1
      %p109 = por %p107, %p108
      %p111 = scmp.ne.s32.totalorder %s96, %s110
      %p112 = scmp.eq.s32.totalorder %s23, 0
      %p113 = por %p111, %p112
      %s115 = sadd.s32 %s114, 1
      %p118 = scmp.eq.s32.totalorder %s17, 1
      %p119 = scmp.ne.s32.totalorder %s114, %s116
      %p120 = scmp.eq.s32.totalorder %s17, 0
      %p121 = por %p119, %p120
      %p122 = scmp.ne.s32.totalorder %s114, %s116
      %p123 = scmp.eq.s32.totalorder %s22, 1
      %p124 = por %p122, %p123
      %p125 = scmp.ne.s32.totalorder %s116, %s117
      %p126 = scmp.eq.s32.totalorder %s22, 0
      %p127 = por %p125, %p126
      %p128 = scmp.ne.s32.totalorder %s116, %s117
      %p129 = scmp.eq.s32.totalorder %s23, 1
      %p130 = por %p128, %p129
      %p132 = scmp.ne.s32.totalorder %s117, %s131
      %p133 = scmp.eq.s32.totalorder %s23, 0
      %p134 = por %p132, %p133
      %s136 = sadd.s32 %s135, 1
      %p139 = scmp.eq.s32.totalorder %s17, 1
      %p140 = scmp.ne.s32.totalorder %s135, %s137
      %p141 = scmp.eq.s32.totalorder %s17, 0
      %p142 = por %p140, %p141
      %p143 = scmp.ne.s32.totalorder %s135, %s137
      %p144 = scmp.eq.s32.totalorder %s22, 1
      %p145 = por %p143, %p144
      %p146 = scmp.ne.s32.totalorder %s137, %s138
      %p147 = scmp.eq.s32.totalorder %s22, 0
      %p148 = por %p146, %p147
      %p149 = scmp.ne.s32.totalorder %s137, %s138
      %p150 = scmp.eq.s32.totalorder %s23, 1
      %p151 = por %p149, %p150
      %p153 = scmp.ne.s32.totalorder %s138, %s152
      %p154 = scmp.eq.s32.totalorder %s23, 0
      %p155 = por %p153, %p154
      %s156 = ssub.s32 %s17, %s24
      %p157 = scmp.eq.s32.totalorder %s156, 0
      %s159 = sadd.s32 %s158, 1
      %s160 = scalar_select %p157, %s158, %s159
      %p163 = pneg %p157
      %p164 = scmp.eq.s32.totalorder %s17, 1
      %p165 = por %p163, %p164
      %p166 = scmp.ne.s32.totalorder %s158, %s161
      %p167 = scmp.eq.s32.totalorder %s17, 0
      %p168 = por %p166, %p167
      %p169 = scmp.ne.s32.totalorder %s158, %s161
      %p170 = scmp.eq.s32.totalorder %s22, 1
      %p171 = por %p169, %p170
      %p172 = scmp.ne.s32.totalorder %s161, %s162
      %p173 = scmp.eq.s32.totalorder %s22, 0
      %p174 = por %p172, %p173
      %p175 = scmp.ne.s32.totalorder %s161, %s162
      %p176 = scmp.eq.s32.totalorder %s23, 1
      %p177 = por %p175, %p176
      %p179 = scmp.ne.s32.totalorder %s162, %s178
      %p180 = scmp.eq.s32.totalorder %s23, 0
      %p181 = por %p179, %p180
      %s182 = ssub.s32 %s17, %s24
      %p183 = scmp.eq.s32.totalorder %s182, 0
      %s185 = sadd.s32 %s184, 1
      %s186 = scalar_select %p183, %s184, %s185
      %p189 = pneg %p183
      %p190 = scmp.eq.s32.totalorder %s17, 1
      %p191 = por %p189, %p190
      %p192 = scmp.ne.s32.totalorder %s184, %s187
      %p193 = scmp.eq.s32.totalorder %s17, 0
      %p194 = por %p192, %p193
      %p195 = scmp.ne.s32.totalorder %s184, %s187
      %p196 = scmp.eq.s32.totalorder %s22, 1
      %p197 = por %p195, %p196
      %p198 = scmp.ne.s32.totalorder %s187, %s188
      %p199 = scmp.eq.s32.totalorder %s22, 0
      %p200 = por %p198, %p199
      %p201 = scmp.ne.s32.totalorder %s187, %s188
      %p202 = scmp.eq.s32.totalorder %s23, 1
      %p203 = por %p201, %p202
      %p205 = scmp.ne.s32.totalorder %s188, %s204
      %p206 = scmp.eq.s32.totalorder %s23, 0
      %p207 = por %p205, %p206
      %p208 = scmp.le.s32.totalorder 1, %s17
      %p209 = scmp.lt.s32.totalorder %s17, 3
      %p210 = pnand %p208, %p209
      %p211 = pneg %p210
      // Predicated region
      $region9: #{_lambda_.1} parent=5 // pred_check
        _
      $region10: #{_lambda_.1} parent=5 // pred_check_branch
        %213 = sbr.rel (%p210) target = $region12
      $region11: #{_lambda_.1} parent=5 // pred_region
        %s214 = ssub.s32 %s17, 1
        // Predicated region
        $region13: #{_lambda_.1} parent=11 // pred_check
          %p215 = pneg %p64
        $region14: #{_lambda_.1} parent=11 // pred_check_branch
          %217 = sbr.rel (%p215) target = $region16
        $region15: #{_lambda_.1} parent=11 // pred_region
          _
        $region16: #{_lambda_.1} parent=11 // pred_fallthru
          _
        // Predicated region
        $region17: #{_lambda_.1} parent=11 // pred_check
          %p218 = pneg %p85
        $region18: #{_lambda_.1} parent=11 // pred_check_branch
          %220 = sbr.rel (%p218) target = $region20
        $region19: #{_lambda_.1} parent=11 // pred_region
          _
        $region20: #{_lambda_.1} parent=11 // pred_fallthru
          _
        // Predicated region
        $region21: #{_lambda_.1} parent=11 // pred_check
          %p221 = pneg %p106
        $region22: #{_lambda_.1} parent=11 // pred_check_branch
          %223 = sbr.rel (%p221) target = $region24
        $region23: #{_lambda_.1} parent=11 // pred_region
          _
        $region24: #{_lambda_.1} parent=11 // pred_fallthru
          _
        // Predicated region
        $region25: #{_lambda_.1} parent=11 // pred_check
          %p224 = pneg %p127
        $region26: #{_lambda_.1} parent=11 // pred_check_branch
          %226 = sbr.rel (%p224) target = $region28
        $region27: #{_lambda_.1} parent=11 // pred_region
          _
        $region28: #{_lambda_.1} parent=11 // pred_fallthru
          _
        // Predicated region
        $region29: #{_lambda_.1} parent=11 // pred_check
          %p227 = pneg %p148
        $region30: #{_lambda_.1} parent=11 // pred_check_branch
          %229 = sbr.rel (%p227) target = $region32
        $region31: #{_lambda_.1} parent=11 // pred_region
          _
        $region32: #{_lambda_.1} parent=11 // pred_fallthru
          _
      $region12: #{_lambda_.1} parent=5 // pred_fallthru
        _
      %p230 = scmp.lt.s32.totalorder %s17, 2
      // Predicated region
      $region33: #{_lambda_.1} parent=5 // pred_check
        %p231 = pneg %p230
      $region34: #{_lambda_.1} parent=5 // pred_check_branch
        %233 = sbr.rel (%p231) target = $region36
      $region35: #{_lambda_.1} parent=5 // pred_region
        // Predicated region
        $region37: #{_lambda_.1} parent=35 // pred_check
          %p234 = pneg %p37
        $region38: #{_lambda_.1} parent=35 // pred_check_branch
          %236 = sbr.rel (%p234) target = $region40
        $region39: #{_lambda_.1} parent=35 // pred_region
          %s237 = smul.u32 2, %s17
          %p238 = scmp.lt.s32.totalorder %s237, 3
          %s239 = scalar_select %p238, %s237, 3
          %s240 = smul.addr %s239, 2
          %s241 = scalar_lea.vmem %s0, %s240
          %s242 = smul.u32 2, %s17
        $region40: #{_lambda_.1} parent=35 // pred_fallthru
          _
      $region36: #{_lambda_.1} parent=5 // pred_fallthru
        _
      %p243 = scmp.le.s32.totalorder 1, %s17
      %p244 = scmp.lt.s32.totalorder %s17, 3
      %p245 = pnand %p243, %p244
      %p246 = pneg %p245
      // Predicated region
      $region41: #{_lambda_.1} parent=5 // pred_check
        _
      $region42: #{_lambda_.1} parent=5 // pred_check_branch
        %248 = sbr.rel (%p245) target = $region44
      $region43: #{_lambda_.1} parent=5 // pred_region
        %s249 = ssub.s32 %s17, 1
        %s250 = smul.u32 2, %s22
        %p251 = scmp.lt.s32.totalorder %s250, 3
        %s252 = scalar_select %p251, %s250, 3
        %s253 = smul.addr %s252, 2
        %s254 = scalar_lea.vmem %s0, %s253
        %p255 = pneg %p43
        %p256 = pneg %p40
        %p257 = pneg %p64
        %p258 = pneg %p61
        %p259 = pneg %p85
        %p260 = pneg %p82
        %p261 = pneg %p106
        %p262 = pneg %p103
        %p263 = pneg %p127
        %p264 = pneg %p124
        %p265 = pneg %p148
        %p266 = pneg %p145
        %p267 = pneg %p174
        %p268 = pneg %p171
        %s269 = smul.u32 2, %s22
        %p270 = scmp.lt.s32.totalorder %s269, 3
        %s271 = scalar_select %p270, %s269, 3
        %s272 = smul.addr %s271, 8
        %s273 = scalar_lea.vmem %s6, %s272
        %p274 = pneg %p200
        %p275 = pneg %p197
        %s276 = sand.u32 %s187, 1
        %s277 = scalar_lea.sflag [#allocation3], %s276
        %s278 = sand.u32 %s187, 1
        %s279 = scalar_lea.vmem [#allocation2], %s278
        %s280 = smul.u32 2, %s22
        %p281 = scmp.lt.s32.totalorder %s280, 3
        %s282 = scalar_select %p281, %s280, 3
        %s283 = smul.addr %s282, 2
        %s284 = scalar_lea.vmem %s0, %s283
        %s285 = smul.u32 2, %s22
        %s286 = smul.u32 2, %s22
        %p287 = scmp.lt.s32.totalorder %s286, 3
        %s288 = scalar_select %p287, %s286, 3
        %s289 = smul.addr %s288, 8
        %s290 = scalar_lea.vmem %s6, %s289
        %s291 = smul.u32 2, %s22
        %v293 = vld [vmem:[%s284] sm:$0xf]
        %v294 = vld [vmem:[%s1] sm:$0xf]
        %296 = vst [vmem:[#allocation1] ss:$4 sm:$0xff] %v293
        %v297 = vld.sshfl [vmem:[#allocation1] sm:$0xff pattern:$0x73625140]
        %v298 = vld.sshfl [vmem:[#allocation1 + $0x8] sm:$0xff pattern:$0x73625140]
        %vm299 = vcmask 31744
        %v301 = vsel %vm299, %v294, 0
        %vm303 = vcmask 1041408
        %v304 = vsel %vm303, %v297, 0
        %v306 = vsel %vm303, %v298, 0
        %308 = vmatpush.bf16.msra.mxu0 0
        %309 = vmatpush.bf16.msra.mxu0 0
        %310 = vmatpush.bf16.msra.mxu0 0
        %311 = vmatpush.bf16.msra.mxu0 0
        %312 = vmatpush.bf16.msra.mxu0 0
        %313 = vmatpush.bf16.msra.mxu0 0
        %314 = vmatpush.bf16.msra.mxu0 0
        %315 = vmatpush.bf16.msra.mxu0 %v304
        %316 = vmatmul.bf16.gmra.mxu0 %v301
        %v317 = vpop.f32.mrf.mxu0
        %v318 = vadd.f32 0.0, %v317
        %v319 = vpop.f32.mrf.mxu0
        %320 = vdwg.mxu0
        %321 = vmatpush.bf16.msra.mxu0 0
        %322 = vmatpush.bf16.msra.mxu0 0
        %323 = vmatpush.bf16.msra.mxu0 0
        %324 = vmatpush.bf16.msra.mxu0 0
        %325 = vmatpush.bf16.msra.mxu0 0
        %326 = vmatpush.bf16.msra.mxu0 0
        %327 = vmatpush.bf16.msra.mxu0 0
        %328 = vmatpush.bf16.msra.mxu0 %v306
        %329 = vmatmul.bf16.gmra.mxu0 %v301
        %v330 = vpop.f32.mrf.mxu0
        %v331 = vadd.f32 0.0, %v330
        %v332 = vpop.f32.mrf.mxu0
        %333 = vdwg.mxu0
        %334 = vrot.lane.b32.xlu0 %v318, 17
        %v335 = vpop.permute.xlu0 %334
        %336 = vrot.lane.b32.xlu0 %v331, 17
        %v337 = vpop.permute.xlu0 %336
        %v338 = vlaneseq
        %v339 = vand.u32 %v338, 127
        %vm340 = vcmp.lt.s32.totalorder %v339, 17
        %v341 = vsel %vm340, %v335, %v337
        %v342 = vsel %vm340, %v337, %v335
        %v343 = vld [vmem:[%s3] ss:$8 sm:$0x3]
        %v345 = vperm.slane %v343, 0
        %v346 = vperm.slane %v343, 1
        %v349 = vmul.f32 %v342, %v345
        %v350 = vmul.f32 %v341, %v346
        %v351 = vld [vmem:[%s1 + $0x4] sm:$0xf]
        %352 = vst [vmem:[#allocation1] ss:$4 sm:$0xff] %v293
        %v353 = vld.sshfl [vmem:[#allocation1] sm:$0xff pattern:$0x73625140]
        %v354 = vld.sshfl [vmem:[#allocation1 + $0x8] sm:$0xff pattern:$0x73625140]
        %v356 = vsel %vm299, %v351, 0
        %v358 = vsel %vm303, %v353, 0
        %v360 = vsel %vm303, %v354, 0
        %362 = vmatpush.bf16.msra.mxu0 0
        %363 = vmatpush.bf16.msra.mxu0 0
        %364 = vmatpush.bf16.msra.mxu0 0
        %365 = vmatpush.bf16.msra.mxu0 0
        %366 = vmatpush.bf16.msra.mxu0 0
        %367 = vmatpush.bf16.msra.mxu0 0
        %368 = vmatpush.bf16.msra.mxu0 0
        %369 = vmatpush.bf16.msra.mxu0 %v358
        %370 = vmatmul.bf16.gmra.mxu0 %v356
        %v371 = vpop.f32.mrf.mxu0
        %v372 = vadd.f32 0.0, %v371
        %v373 = vpop.f32.mrf.mxu0
        %374 = vdwg.mxu0
        %375 = vmatpush.bf16.msra.mxu0 0
        %376 = vmatpush.bf16.msra.mxu0 0
        %377 = vmatpush.bf16.msra.mxu0 0
        %378 = vmatpush.bf16.msra.mxu0 0
        %379 = vmatpush.bf16.msra.mxu0 0
        %380 = vmatpush.bf16.msra.mxu0 0
        %381 = vmatpush.bf16.msra.mxu0 0
        %382 = vmatpush.bf16.msra.mxu0 %v360
        %383 = vmatmul.bf16.gmra.mxu0 %v356
        %v384 = vpop.f32.mrf.mxu0
        %v385 = vadd.f32 0.0, %v384
        %v386 = vpop.f32.mrf.mxu0
        %387 = vdwg.mxu0
        %388 = vrot.lane.b32.xlu0 %v372, 16
        %v389 = vpop.permute.xlu0 %388
        %390 = vrot.lane.b32.xlu0 %v385, 16
        %v391 = vpop.permute.xlu0 %390
        %vm392 = vcmp.lt.s32.totalorder %v339, 16
        %v393 = vsel %vm392, %v389, %v391
        %v394 = vsel %vm392, %v391, %v389
        %s395 = scalar_lea.vmem %s3, 1
        %v396 = vld [vmem:[%s395] ss:$8 sm:$0x3]
        %v398 = vperm.slane %v396, 0
        %v399 = vperm.slane %v396, 1
        %v402 = vmul.f32 %v394, %v398
        %v403 = vmul.f32 %v393, %v399
        %v404 = vadd.f32 %v349, %v402
        %v405 = vadd.f32 %v350, %v403
        %v406 = vld [vmem:[%s1 + $0x8] sm:$0xf]
        %407 = vst [vmem:[#allocation1] ss:$4 sm:$0xff] %v293
        %v408 = vld.sshfl [vmem:[#allocation1] sm:$0xff pattern:$0x73625140]
        %v409 = vld.sshfl [vmem:[#allocation1 + $0x8] sm:$0xff pattern:$0x73625140]
        %v411 = vsel %vm299, %v406, 0
        %v413 = vsel %vm303, %v408, 0
        %v415 = vsel %vm303, %v409, 0
        %417 = vmatpush.bf16.msra.mxu0 0
        %418 = vmatpush.bf16.msra.mxu0 0
        %419 = vmatpush.bf16.msra.mxu0 0
        %420 = vmatpush.bf16.msra.mxu0 0
        %421 = vmatpush.bf16.msra.mxu0 0
        %422 = vmatpush.bf16.msra.mxu0 0
        %423 = vmatpush.bf16.msra.mxu0 0
        %424 = vmatpush.bf16.msra.mxu0 %v413
        %425 = vmatmul.bf16.gmra.mxu0 %v411
        %v426 = vpop.f32.mrf.mxu0
        %v427 = vadd.f32 0.0, %v426
        %v428 = vpop.f32.mrf.mxu0
        %429 = vdwg.mxu0
        %430 = vmatpush.bf16.msra.mxu0 0
        %431 = vmatpush.bf16.msra.mxu0 0
        %432 = vmatpush.bf16.msra.mxu0 0
        %433 = vmatpush.bf16.msra.mxu0 0
        %434 = vmatpush.bf16.msra.mxu0 0
        %435 = vmatpush.bf16.msra.mxu0 0
        %436 = vmatpush.bf16.msra.mxu0 0
        %437 = vmatpush.bf16.msra.mxu0 %v415
        %438 = vmatmul.bf16.gmra.mxu0 %v411
        %v439 = vpop.f32.mrf.mxu0
        %v440 = vadd.f32 0.0, %v439
        %v441 = vpop.f32.mrf.mxu0
        %442 = vdwg.mxu0
        %443 = vrot.lane.b32.xlu0 %v427, 15
        %v444 = vpop.permute.xlu0 %443
        %445 = vrot.lane.b32.xlu0 %v440, 15
        %v446 = vpop.permute.xlu0 %445
        %vm447 = vcmp.lt.s32.totalorder %v339, 15
        %v448 = vsel %vm447, %v444, %v446
        %v449 = vsel %vm447, %v446, %v444
        %s450 = scalar_lea.vmem %s3, 2
        %v451 = vld [vmem:[%s450] ss:$8 sm:$0x3]
        %v453 = vperm.slane %v451, 0
        %v454 = vperm.slane %v451, 1
        %v457 = vmul.f32 %v449, %v453
        %v458 = vmul.f32 %v448, %v454
        %v459 = vadd.f32 %v404, %v457
        %v460 = vadd.f32 %v405, %v458
        %v461 = vld [vmem:[%s1 + $0xc] sm:$0xf]
        %462 = vst [vmem:[#allocation1] ss:$4 sm:$0xff] %v293
        %v463 = vld.sshfl [vmem:[#allocation1] sm:$0xff pattern:$0x73625140]
        %v464 = vld.sshfl [vmem:[#allocation1 + $0x8] sm:$0xff pattern:$0x73625140]
        %v466 = vsel %vm299, %v461, 0
        %v468 = vsel %vm303, %v463, 0
        %v470 = vsel %vm303, %v464, 0
        %472 = vmatpush.bf16.msra.mxu0 0
        %473 = vmatpush.bf16.msra.mxu0 0
        %474 = vmatpush.bf16.msra.mxu0 0
        %475 = vmatpush.bf16.msra.mxu0 0
        %476 = vmatpush.bf16.msra.mxu0 0
        %477 = vmatpush.bf16.msra.mxu0 0
        %478 = vmatpush.bf16.msra.mxu0 0
        %479 = vmatpush.bf16.msra.mxu0 %v468
        %480 = vmatmul.bf16.gmra.mxu0 %v466
        %v481 = vpop.f32.mrf.mxu0
        %v482 = vadd.f32 0.0, %v481
        %v483 = vpop.f32.mrf.mxu0
        %484 = vdwg.mxu0
        %485 = vmatpush.bf16.msra.mxu0 0
        %486 = vmatpush.bf16.msra.mxu0 0
        %487 = vmatpush.bf16.msra.mxu0 0
        %488 = vmatpush.bf16.msra.mxu0 0
        %489 = vmatpush.bf16.msra.mxu0 0
        %490 = vmatpush.bf16.msra.mxu0 0
        %491 = vmatpush.bf16.msra.mxu0 0
        %492 = vmatpush.bf16.msra.mxu0 %v470
        %493 = vmatmul.bf16.gmra.mxu0 %v466
        %v494 = vpop.f32.mrf.mxu0
        %v495 = vadd.f32 0.0, %v494
        %v496 = vpop.f32.mrf.mxu0
        %497 = vdwg.mxu0
        %498 = vrot.lane.b32.xlu0 %v482, 1
        %v499 = vpop.permute.xlu0 %498
        %500 = vrot.lane.b32.xlu0 %v495, 1
        %v501 = vpop.permute.xlu0 %500
        %vm502 = vcmp.lt.s32.totalorder %v339, 1
        %v503 = vsel %vm502, %v499, %v501
        %v504 = vsel %vm502, %v501, %v499
        %s505 = scalar_lea.vmem %s3, 3
        %v506 = vld [vmem:[%s505] ss:$8 sm:$0x3]
        %v508 = vperm.slane %v506, 0
        %v509 = vperm.slane %v506, 1
        %v512 = vmul.f32 %v504, %v508
        %v513 = vmul.f32 %v503, %v509
        %v514 = vadd.f32 %v459, %v512
        %v515 = vadd.f32 %v460, %v513
        %v516 = vld [vmem:[%s1 + $0x10] sm:$0xf]
        %517 = vst [vmem:[#allocation1] ss:$4 sm:$0xff] %v293
        %v518 = vld.sshfl [vmem:[#allocation1] sm:$0xff pattern:$0x73625140]
        %v519 = vld.sshfl [vmem:[#allocation1 + $0x8] sm:$0xff pattern:$0x73625140]
        %v521 = vsel %vm299, %v516, 0
        %v523 = vsel %vm303, %v518, 0
        %v525 = vsel %vm303, %v519, 0
        %527 = vmatpush.bf16.msra.mxu0 0
        %528 = vmatpush.bf16.msra.mxu0 0
        %529 = vmatpush.bf16.msra.mxu0 0
        %530 = vmatpush.bf16.msra.mxu0 0
        %531 = vmatpush.bf16.msra.mxu0 0
        %532 = vmatpush.bf16.msra.mxu0 0
        %533 = vmatpush.bf16.msra.mxu0 0
        %534 = vmatpush.bf16.msra.mxu0 %v523
        %535 = vmatmul.bf16.gmra.mxu0 %v521
        %v536 = vpop.f32.mrf.mxu0
        %v537 = vadd.f32 0.0, %v536
        %v538 = vpop.f32.mrf.mxu0
        %539 = vdwg.mxu0
        %540 = vmatpush.bf16.msra.mxu0 0
        %541 = vmatpush.bf16.msra.mxu0 0
        %542 = vmatpush.bf16.msra.mxu0 0
        %543 = vmatpush.bf16.msra.mxu0 0
        %544 = vmatpush.bf16.msra.mxu0 0
        %545 = vmatpush.bf16.msra.mxu0 0
        %546 = vmatpush.bf16.msra.mxu0 0
        %547 = vmatpush.bf16.msra.mxu0 %v525
        %548 = vmatmul.bf16.gmra.mxu0 %v521
        %v549 = vpop.f32.mrf.mxu0
        %v550 = vadd.f32 0.0, %v549
        %v551 = vpop.f32.mrf.mxu0
        %552 = vdwg.mxu0
        %v553 = vadd.f32 %v514, %v537
        %v554 = vadd.f32 %v515, %v550
        %v555 = vld [vmem:[%s1 + $0x14] sm:$0xf]
        %556 = vst [vmem:[#allocation1] ss:$4 sm:$0xff] %v293
        %v557 = vld.sshfl [vmem:[#allocation1] sm:$0xff pattern:$0x73625140]
        %v558 = vld.sshfl [vmem:[#allocation1 + $0x8] sm:$0xff pattern:$0x73625140]
        %v560 = vsel %vm299, %v555, 0
        %v562 = vsel %vm303, %v557, 0
        %v564 = vsel %vm303, %v558, 0
        %566 = vmatpush.bf16.msra.mxu0 0
        %567 = vmatpush.bf16.msra.mxu0 0
        %568 = vmatpush.bf16.msra.mxu0 0
        %569 = vmatpush.bf16.msra.mxu0 0
        %570 = vmatpush.bf16.msra.mxu0 0
        %571 = vmatpush.bf16.msra.mxu0 0
        %572 = vmatpush.bf16.msra.mxu0 0
        %573 = vmatpush.bf16.msra.mxu0 %v562
        %574 = vmatmul.bf16.gmra.mxu0 %v560
        %v575 = vpop.f32.mrf.mxu0
        %v576 = vadd.f32 0.0, %v575
        %v577 = vpop.f32.mrf.mxu0
        %578 = vdwg.mxu0
        %579 = vmatpush.bf16.msra.mxu0 0
        %580 = vmatpush.bf16.msra.mxu0 0
        %581 = vmatpush.bf16.msra.mxu0 0
        %582 = vmatpush.bf16.msra.mxu0 0
        %583 = vmatpush.bf16.msra.mxu0 0
        %584 = vmatpush.bf16.msra.mxu0 0
        %585 = vmatpush.bf16.msra.mxu0 0
        %586 = vmatpush.bf16.msra.mxu0 %v564
        %587 = vmatmul.bf16.gmra.mxu0 %v560
        %v588 = vpop.f32.mrf.mxu0
        %v589 = vadd.f32 0.0, %v588
        %v590 = vpop.f32.mrf.mxu0
        %591 = vdwg.mxu0
        %592 = vrot.lane.b32.xlu0 %v576, 127
        %v593 = vpop.permute.xlu0 %592
        %594 = vrot.lane.b32.xlu0 %v589, 127
        %v595 = vpop.permute.xlu0 %594
        %vm596 = vcmp.lt.s32.totalorder %v339, 127
        %v597 = vsel %vm596, %v593, %v595
        %v598 = vsel %vm596, %v595, %v593
        %s599 = scalar_lea.vmem %s3, 5
        %v600 = vld [vmem:[%s599] ss:$8 sm:$0x3]
        %v602 = vperm.slane %v600, 0
        %v603 = vperm.slane %v600, 1
        %v606 = vmul.f32 %v597, %v602
        %v607 = vmul.f32 %v598, %v603
        %v608 = vadd.f32 %v553, %v606
        %v609 = vadd.f32 %v554, %v607
        %v610 = vld [vmem:[%s1 + $0x18] sm:$0xf]
        %611 = vst [vmem:[#allocation1] ss:$4 sm:$0xff] %v293
        %v612 = vld.sshfl [vmem:[#allocation1] sm:$0xff pattern:$0x73625140]
        %v613 = vld.sshfl [vmem:[#allocation1 + $0x8] sm:$0xff pattern:$0x73625140]
        %v615 = vsel %vm299, %v610, 0
        %v617 = vsel %vm303, %v612, 0
        %v619 = vsel %vm303, %v613, 0
        %621 = vmatpush.bf16.msra.mxu0 0
        %622 = vmatpush.bf16.msra.mxu0 0
        %623 = vmatpush.bf16.msra.mxu0 0
        %624 = vmatpush.bf16.msra.mxu0 0
        %625 = vmatpush.bf16.msra.mxu0 0
        %626 = vmatpush.bf16.msra.mxu0 0
        %627 = vmatpush.bf16.msra.mxu0 0
        %628 = vmatpush.bf16.msra.mxu0 %v617
        %629 = vmatmul.bf16.gmra.mxu0 %v615
        %v630 = vpop.f32.mrf.mxu0
        %v631 = vadd.f32 0.0, %v630
        %v632 = vpop.f32.mrf.mxu0
        %633 = vdwg.mxu0
        %634 = vmatpush.bf16.msra.mxu0 0
        %635 = vmatpush.bf16.msra.mxu0 0
        %636 = vmatpush.bf16.msra.mxu0 0
        %637 = vmatpush.bf16.msra.mxu0 0
        %638 = vmatpush.bf16.msra.mxu0 0
        %639 = vmatpush.bf16.msra.mxu0 0
        %640 = vmatpush.bf16.msra.mxu0 0
        %641 = vmatpush.bf16.msra.mxu0 %v619
        %642 = vmatmul.bf16.gmra.mxu0 %v615
        %v643 = vpop.f32.mrf.mxu0
        %v644 = vadd.f32 0.0, %v643
        %v645 = vpop.f32.mrf.mxu0
        %646 = vdwg.mxu0
        %647 = vrot.lane.b32.xlu0 %v631, 113
        %v648 = vpop.permute.xlu0 %647
        %649 = vrot.lane.b32.xlu0 %v644, 113
        %v650 = vpop.permute.xlu0 %649
        %vm651 = vcmp.lt.s32.totalorder %v339, 113
        %v652 = vsel %vm651, %v648, %v650
        %v653 = vsel %vm651, %v650, %v648
        %s654 = scalar_lea.vmem %s3, 6
        %v655 = vld [vmem:[%s654] ss:$8 sm:$0x3]
        %v657 = vperm.slane %v655, 0
        %v658 = vperm.slane %v655, 1
        %v661 = vmul.f32 %v652, %v657
        %v662 = vmul.f32 %v653, %v658
        %v663 = vadd.f32 %v608, %v661
        %v664 = vadd.f32 %v609, %v662
        %v665 = vld [vmem:[%s1 + $0x1c] sm:$0xf]
        %666 = vst [vmem:[#allocation1] ss:$4 sm:$0xff] %v293
        %v667 = vld.sshfl [vmem:[#allocation1] sm:$0xff pattern:$0x73625140]
        %v668 = vld.sshfl [vmem:[#allocation1 + $0x8] sm:$0xff pattern:$0x73625140]
        %v670 = vsel %vm299, %v665, 0
        %v672 = vsel %vm303, %v667, 0
        %v674 = vsel %vm303, %v668, 0
        %676 = vmatpush.bf16.msra.mxu0 0
        %677 = vmatpush.bf16.msra.mxu0 0
        %678 = vmatpush.bf16.msra.mxu0 0
        %679 = vmatpush.bf16.msra.mxu0 0
        %680 = vmatpush.bf16.msra.mxu0 0
        %681 = vmatpush.bf16.msra.mxu0 0
        %682 = vmatpush.bf16.msra.mxu0 0
        %683 = vmatpush.bf16.msra.mxu0 %v672
        %684 = vmatmul.bf16.gmra.mxu0 %v670
        %v685 = vpop.f32.mrf.mxu0
        %v686 = vadd.f32 0.0, %v685
        %v687 = vpop.f32.mrf.mxu0
        %688 = vdwg.mxu0
        %689 = vmatpush.bf16.msra.mxu0 0
        %690 = vmatpush.bf16.msra.mxu0 0
        %691 = vmatpush.bf16.msra.mxu0 0
        %692 = vmatpush.bf16.msra.mxu0 0
        %693 = vmatpush.bf16.msra.mxu0 0
        %694 = vmatpush.bf16.msra.mxu0 0
        %695 = vmatpush.bf16.msra.mxu0 0
        %696 = vmatpush.bf16.msra.mxu0 %v674
        %697 = vmatmul.bf16.gmra.mxu0 %v670
        %v698 = vpop.f32.mrf.mxu0
        %v699 = vadd.f32 0.0, %v698
        %v700 = vpop.f32.mrf.mxu0
        %701 = vdwg.mxu0
        %702 = vrot.lane.b32.xlu0 %v686, 112
        %v703 = vpop.permute.xlu0 %702
        %704 = vrot.lane.b32.xlu0 %v699, 112
        %v705 = vpop.permute.xlu0 %704
        %vm706 = vcmp.lt.s32.totalorder %v339, 112
        %v707 = vsel %vm706, %v703, %v705
        %v708 = vsel %vm706, %v705, %v703
        %s709 = scalar_lea.vmem %s3, 7
        %v710 = vld [vmem:[%s709] ss:$8 sm:$0x3]
        %v712 = vperm.slane %v710, 0
        %v713 = vperm.slane %v710, 1
        %v716 = vmul.f32 %v707, %v712
        %v717 = vmul.f32 %v708, %v713
        %v718 = vadd.f32 %v663, %v716
        %v719 = vadd.f32 %v664, %v717
        %v720 = vld [vmem:[%s1 + $0x20] sm:$0xf]
        %721 = vst [vmem:[#allocation1] ss:$4 sm:$0xff] %v293
        %v722 = vld.sshfl [vmem:[#allocation1] sm:$0xff pattern:$0x73625140]
        %v723 = vld.sshfl [vmem:[#allocation1 + $0x8] sm:$0xff pattern:$0x73625140]
        %v725 = vsel %vm299, %v720, 0
        %v727 = vsel %vm303, %v722, 0
        %v729 = vsel %vm303, %v723, 0
        %731 = vmatpush.bf16.msra.mxu0 0
        %732 = vmatpush.bf16.msra.mxu0 0
        %733 = vmatpush.bf16.msra.mxu0 0
        %734 = vmatpush.bf16.msra.mxu0 0
        %735 = vmatpush.bf16.msra.mxu0 0
        %736 = vmatpush.bf16.msra.mxu0 0
        %737 = vmatpush.bf16.msra.mxu0 0
        %738 = vmatpush.bf16.msra.mxu0 %v727
        %739 = vmatmul.bf16.gmra.mxu0 %v725
        %v740 = vpop.f32.mrf.mxu0
        %v741 = vadd.f32 0.0, %v740
        %v742 = vpop.f32.mrf.mxu0
        %743 = vdwg.mxu0
        %744 = vmatpush.bf16.msra.mxu0 0
        %745 = vmatpush.bf16.msra.mxu0 0
        %746 = vmatpush.bf16.msra.mxu0 0
        %747 = vmatpush.bf16.msra.mxu0 0
        %748 = vmatpush.bf16.msra.mxu0 0
        %749 = vmatpush.bf16.msra.mxu0 0
        %750 = vmatpush.bf16.msra.mxu0 0
        %751 = vmatpush.bf16.msra.mxu0 %v729
        %752 = vmatmul.bf16.gmra.mxu0 %v725
        %v753 = vpop.f32.mrf.mxu0
        %v754 = vadd.f32 0.0, %v753
        %v755 = vpop.f32.mrf.mxu0
        %756 = vdwg.mxu0
        %757 = vrot.lane.b32.xlu0 %v741, 111
        %v758 = vpop.permute.xlu0 %757
        %759 = vrot.lane.b32.xlu0 %v754, 111
        %v760 = vpop.permute.xlu0 %759
        %vm761 = vcmp.lt.s32.totalorder %v339, 111
        %v762 = vsel %vm761, %v758, %v760
        %v763 = vsel %vm761, %v760, %v758
        %s764 = scalar_lea.vmem %s3, 16
        %v765 = vld [vmem:[%s764] ss:$8 sm:$0x3]
        %v767 = vperm.slane %v765, 0
        %v768 = vperm.slane %v765, 1
        %v771 = vmul.f32 %v762, %v767
        %v772 = vmul.f32 %v763, %v768
        %v773 = vadd.f32 %v718, %v771
        %v774 = vadd.f32 %v719, %v772
        %v775 = vld [vmem:[%s2] sm:$0xff]
        %777 = vset.pattern.permute.xlu0 0
        %778 = vperm.xlu0 %777, %v775
        %v779 = vpop.permute.xlu0 %778
        %v781 = vadd.f32 %v773, %v779
        %v782 = vadd.f32 %v774, %v779
        %783 = vst [vmem:[%s290] sm:$0xff] %v781
        %784 = vst [vmem:[%s290 + $0x8] sm:$0xff] %v782
        %v785 = vmax.f32 %v781, 0.0
        %v786 = vmax.f32 %v782, 0.0
        %787 = vrot.lane.b32.xlu0 %v785, 127
        %v788 = vpop.permute.xlu0 %787
        %789 = vrot.lane.b32.xlu0 %v786, 127
        %v790 = vpop.permute.xlu0 %789
        %v791 = vsel %vm596, %v788, %v790
        %v792 = vsel %vm596, %v790, %v788
        %v793 = vmax.f32 %v785, %v791
        %v794 = vmax.f32 %v786, %v792
        %795 = vrot.lane.b32.xlu0 %v785, 112
        %v796 = vpop.permute.xlu0 %795
        %797 = vrot.lane.b32.xlu0 %v786, 112
        %v798 = vpop.permute.xlu0 %797
        %v799 = vsel %vm706, %v796, %v798
        %v800 = vsel %vm706, %v798, %v796
        %801 = vrot.lane.b32.xlu0 %v785, 111
        %v802 = vpop.permute.xlu0 %801
        %803 = vrot.lane.b32.xlu0 %v786, 111
        %v804 = vpop.permute.xlu0 %803
        %v805 = vsel %vm761, %v802, %v804
        %v806 = vsel %vm761, %v804, %v802
        %v807 = vmax.f32 %v799, %v805
        %v808 = vmax.f32 %v800, %v806
        %v809 = vmax.f32 %v793, %v807
        %v810 = vmax.f32 %v794, %v808
        %v813 = vrot.slane %v809, 1
        %v814 = vrot.slane %v810, 1
        %v817 = vrot.slane %v809, 2
        %v818 = vrot.slane %v810, 2
        %v821 = vrot.slane %v809, 3
        %v822 = vrot.slane %v810, 3
        %v825 = vrot.slane %v809, 4
        %v826 = vrot.slane %v810, 4
        %v829 = vrot.slane %v809, 5
        %v830 = vrot.slane %v810, 5
        %v833 = vrot.slane %v809, 6
        %v834 = vrot.slane %v810, 6
        %v837 = vrot.slane %v809, 7
        %v838 = vrot.slane %v810, 7
        %v841 = vld [vmem:[%s4] sm:$0xff]
        %v842 = vld [vmem:[%s4 + $0x8] sm:$0xff]
        %v843 = vld [vmem:[%s4 + $0x10] sm:$0xff]
        %v844 = vld [vmem:[%s4 + $0x18] sm:$0xff]
        %v845 = vld [vmem:[%s4 + $0x20] sm:$0xff]
        %v846 = vld [vmem:[%s4 + $0x28] sm:$0xff]
        %v847 = vld [vmem:[%s4 + $0x30] sm:$0xff]
        %v848 = vld [vmem:[%s4 + $0x38] sm:$0xff]
        %v849 = vld [vmem:[%s4 + $0x40] sm:$0xff]
        %v850 = vld [vmem:[%s4 + $0x48] sm:$0xff]
        %v851 = vld [vmem:[%s4 + $0x50] sm:$0xff]
        %v852 = vld [vmem:[%s4 + $0x58] sm:$0xff]
        %v853 = vld [vmem:[%s4 + $0x60] sm:$0xff]
        %v854 = vld [vmem:[%s4 + $0x68] sm:$0xff]
        %v855 = vld [vmem:[%s4 + $0x70] sm:$0xff]
        %v856 = vld [vmem:[%s4 + $0x78] sm:$0xff]
        %v857 = vld [vmem:[%s4 + $0x80] sm:$0xff]
        %v858 = vld [vmem:[%s4 + $0x88] sm:$0xff]
        %v859 = vld [vmem:[%s4 + $0x90] sm:$0xff]
        %v860 = vld [vmem:[%s4 + $0x98] sm:$0xff]
        %v861 = vld [vmem:[%s4 + $0xa0] sm:$0xff]
        %v862 = vld [vmem:[%s4 + $0xa8] sm:$0xff]
        %v863 = vld [vmem:[%s4 + $0xb0] sm:$0xff]
        %v864 = vld [vmem:[%s4 + $0xb8] sm:$0xff]
        %v865 = vld [vmem:[%s4 + $0xc0] sm:$0xff]
        %v866 = vld [vmem:[%s4 + $0xc8] sm:$0xff]
        %v867 = vld [vmem:[%s4 + $0xd0] sm:$0xff]
        %v868 = vld [vmem:[%s4 + $0xd8] sm:$0xff]
        %v869 = vld [vmem:[%s4 + $0xe0] sm:$0xff]
        %v870 = vld [vmem:[%s4 + $0xe8] sm:$0xff]
        %v871 = vld [vmem:[%s4 + $0xf0] sm:$0xff]
        %v872 = vld [vmem:[%s4 + $0xf8] sm:$0xff]
        %v873 = vld [vmem:[%s4 + $0x100] sm:$0xff]
        %v874 = vld [vmem:[%s4 + $0x108] sm:$0xff]
        %v875 = vld [vmem:[%s4 + $0x110] sm:$0xff]
        %v876 = vld [vmem:[%s4 + $0x118] sm:$0xff]
        %v877 = vld [vmem:[%s4 + $0x120] sm:$0xff]
        %v878 = vld [vmem:[%s4 + $0x128] sm:$0xff]
        %v879 = vld [vmem:[%s4 + $0x130] sm:$0xff]
        %v880 = vld [vmem:[%s4 + $0x138] sm:$0xff]
        %v881 = vld [vmem:[%s4 + $0x140] sm:$0xff]
        %v882 = vld [vmem:[%s4 + $0x148] sm:$0xff]
        %v883 = vld [vmem:[%s4 + $0x150] sm:$0xff]
        %v884 = vld [vmem:[%s4 + $0x158] sm:$0xff]
        %v885 = vld [vmem:[%s4 + $0x160] sm:$0xff]
        %v886 = vld [vmem:[%s4 + $0x168] sm:$0xff]
        %v887 = vld [vmem:[%s4 + $0x170] sm:$0xff]
        %v888 = vld [vmem:[%s4 + $0x178] sm:$0xff]
        %v889 = vld [vmem:[%s4 + $0x180] sm:$0xff]
        %v890 = vld [vmem:[%s4 + $0x188] sm:$0xff]
        %v891 = vld [vmem:[%s4 + $0x190] sm:$0xff]
        %v892 = vld [vmem:[%s4 + $0x198] sm:$0xff]
        %v893 = vld [vmem:[%s4 + $0x1a0] sm:$0xff]
        %v894 = vld [vmem:[%s4 + $0x1a8] sm:$0xff]
        %v895 = vld [vmem:[%s4 + $0x1b0] sm:$0xff]
        %v896 = vld [vmem:[%s4 + $0x1b8] sm:$0xff]
        %v897 = vld [vmem:[%s4 + $0x1c0] sm:$0xff]
        %v898 = vld [vmem:[%s4 + $0x1c8] sm:$0xff]
        %v899 = vld [vmem:[%s4 + $0x1d0] sm:$0xff]
        %v900 = vld [vmem:[%s4 + $0x1d8] sm:$0xff]
        %v901 = vld [vmem:[%s4 + $0x1e0] sm:$0xff]
        %v902 = vld [vmem:[%s4 + $0x1e8] sm:$0xff]
        %v903 = vld [vmem:[%s4 + $0x1f0] sm:$0xff]
        %v904 = vld [vmem:[%s4 + $0x1f8] sm:$0xff]
        %v905 = vld [vmem:[%s4 + $0x200] sm:$0xff]
        %v906 = vld [vmem:[%s4 + $0x208] sm:$0xff]
        %v907 = vld [vmem:[%s4 + $0x210] sm:$0xff]
        %v908 = vld [vmem:[%s4 + $0x218] sm:$0xff]
        %v909 = vld [vmem:[%s4 + $0x220] sm:$0xff]
        %v910 = vld [vmem:[%s4 + $0x228] sm:$0xff]
        %v911 = vld [vmem:[%s4 + $0x230] sm:$0xff]
        %v912 = vld [vmem:[%s4 + $0x238] sm:$0xff]
        %v913 = vld [vmem:[%s4 + $0x240] sm:$0xff]
        %v914 = vld [vmem:[%s4 + $0x248] sm:$0xff]
        %v915 = vld [vmem:[%s4 + $0x250] sm:$0xff]
        %v916 = vld [vmem:[%s4 + $0x258] sm:$0xff]
        %v917 = vld [vmem:[%s4 + $0x260] sm:$0xff]
        %v918 = vld [vmem:[%s4 + $0x268] sm:$0xff]
        %v919 = vld [vmem:[%s4 + $0x270] sm:$0xff]
        %v920 = vld [vmem:[%s4 + $0x278] sm:$0xff]
        %v921 = vld [vmem:[%s4 + $0x280] sm:$0xff]
        %v922 = vld [vmem:[%s4 + $0x288] sm:$0xff]
        %v923 = vld [vmem:[%s4 + $0x290] sm:$0xff]
        %v924 = vld [vmem:[%s4 + $0x298] sm:$0xff]
        %v925 = vld [vmem:[%s4 + $0x2a0] sm:$0xff]
        %v926 = vld [vmem:[%s4 + $0x2a8] sm:$0xff]
        %v927 = vld [vmem:[%s4 + $0x2b0] sm:$0xff]
        %v928 = vld [vmem:[%s4 + $0x2b8] sm:$0xff]
        %v929 = vld [vmem:[%s4 + $0x2c0] sm:$0xff]
        %v930 = vld [vmem:[%s4 + $0x2c8] sm:$0xff]
        %v931 = vld [vmem:[%s4 + $0x2d0] sm:$0xff]
        %v932 = vld [vmem:[%s4 + $0x2d8] sm:$0xff]
        %v933 = vld [vmem:[%s4 + $0x2e0] sm:$0xff]
        %v934 = vld [vmem:[%s4 + $0x2e8] sm:$0xff]
        %v935 = vld [vmem:[%s4 + $0x2f0] sm:$0xff]
        %v936 = vld [vmem:[%s4 + $0x2f8] sm:$0xff]
        %v937 = vld [vmem:[%s4 + $0x300] sm:$0xff]
        %v938 = vld [vmem:[%s4 + $0x308] sm:$0xff]
        %v939 = vld [vmem:[%s4 + $0x310] sm:$0xff]
        %v940 = vld [vmem:[%s4 + $0x318] sm:$0xff]
        %v941 = vld [vmem:[%s4 + $0x320] sm:$0xff]
        %v942 = vld [vmem:[%s4 + $0x328] sm:$0xff]
        %v943 = vld [vmem:[%s4 + $0x330] sm:$0xff]
        %v944 = vld [vmem:[%s4 + $0x338] sm:$0xff]
        %v945 = vld [vmem:[%s4 + $0x340] sm:$0xff]
        %v946 = vld [vmem:[%s4 + $0x348] sm:$0xff]
        %v947 = vld [vmem:[%s4 + $0x350] sm:$0xff]
        %v948 = vld [vmem:[%s4 + $0x358] sm:$0xff]
        %v949 = vld [vmem:[%s4 + $0x360] sm:$0xff]
        %v950 = vld [vmem:[%s4 + $0x368] sm:$0xff]
        %v951 = vld [vmem:[%s4 + $0x370] sm:$0xff]
        %v952 = vld [vmem:[%s4 + $0x378] sm:$0xff]
        %v953 = vld [vmem:[%s4 + $0x380] sm:$0xff]
        %v954 = vld [vmem:[%s4 + $0x388] sm:$0xff]
        %v955 = vld [vmem:[%s4 + $0x390] sm:$0xff]
        %v956 = vld [vmem:[%s4 + $0x398] sm:$0xff]
        %v957 = vld [vmem:[%s4 + $0x3a0] sm:$0xff]
        %v958 = vld [vmem:[%s4 + $0x3a8] sm:$0xff]
        %v959 = vld [vmem:[%s4 + $0x3b0] sm:$0xff]
        %v960 = vld [vmem:[%s4 + $0x3b8] sm:$0xff]
        %v961 = vld [vmem:[%s4 + $0x3c0] sm:$0xff]
        %v962 = vld [vmem:[%s4 + $0x3c8] sm:$0xff]
        %v963 = vld [vmem:[%s4 + $0x3d0] sm:$0xff]
        %v964 = vld [vmem:[%s4 + $0x3d8] sm:$0xff]
        %v965 = vld [vmem:[%s4 + $0x3e0] sm:$0xff]
        %v966 = vld [vmem:[%s4 + $0x3e8] sm:$0xff]
        %v967 = vld [vmem:[%s4 + $0x3f0] sm:$0xff]
        %v968 = vld [vmem:[%s4 + $0x3f8] sm:$0xff]
        %v969 = vld [vmem:[%s4 + $0x400] sm:$0xff]
        %v970 = vld [vmem:[%s4 + $0x408] sm:$0xff]
        %v971 = vld [vmem:[%s4 + $0x410] sm:$0xff]
        %v972 = vld [vmem:[%s4 + $0x418] sm:$0xff]
        %v973 = vld [vmem:[%s4 + $0x420] sm:$0xff]
        %v974 = vld [vmem:[%s4 + $0x428] sm:$0xff]
        %v975 = vld [vmem:[%s4 + $0x430] sm:$0xff]
        %v976 = vld [vmem:[%s4 + $0x438] sm:$0xff]
        %v977 = vld [vmem:[%s4 + $0x440] sm:$0xff]
        %v978 = vld [vmem:[%s4 + $0x448] sm:$0xff]
        %v979 = vld [vmem:[%s4 + $0x450] sm:$0xff]
        %v980 = vld [vmem:[%s4 + $0x458] sm:$0xff]
        %v981 = vld [vmem:[%s4 + $0x460] sm:$0xff]
        %v982 = vld [vmem:[%s4 + $0x468] sm:$0xff]
        %v983 = vld [vmem:[%s4 + $0x470] sm:$0xff]
        %v984 = vld [vmem:[%s4 + $0x478] sm:$0xff]
        %v985 = vld [vmem:[%s4 + $0x480] sm:$0xff]
        %v986 = vld [vmem:[%s4 + $0x488] sm:$0xff]
        %v987 = vld [vmem:[%s4 + $0x490] sm:$0xff]
        %v988 = vld [vmem:[%s4 + $0x498] sm:$0xff]
        %v989 = vld [vmem:[%s4 + $0x4a0] sm:$0xff]
        %v990 = vld [vmem:[%s4 + $0x4a8] sm:$0xff]
        %v991 = vld [vmem:[%s4 + $0x4b0] sm:$0xff]
        %v992 = vld [vmem:[%s4 + $0x4b8] sm:$0xff]
        %v993 = vld [vmem:[%s4 + $0x4c0] sm:$0xff]
        %v994 = vld [vmem:[%s4 + $0x4c8] sm:$0xff]
        %v995 = vld [vmem:[%s4 + $0x4d0] sm:$0xff]
        %v996 = vld [vmem:[%s4 + $0x4d8] sm:$0xff]
        %v997 = vld [vmem:[%s4 + $0x4e0] sm:$0xff]
        %v998 = vld [vmem:[%s4 + $0x4e8] sm:$0xff]
        %v999 = vld [vmem:[%s4 + $0x4f0] sm:$0xff]
        %v1000 = vld [vmem:[%s4 + $0x4f8] sm:$0xff]
        %v1001 = vld [vmem:[%s4 + $0x500] sm:$0xff]
        %v1002 = vld [vmem:[%s4 + $0x508] sm:$0xff]
        %v1003 = vld [vmem:[%s4 + $0x510] sm:$0xff]
        %v1004 = vld [vmem:[%s4 + $0x518] sm:$0xff]
        %v1005 = vld [vmem:[%s4 + $0x520] sm:$0xff]
        %v1006 = vld [vmem:[%s4 + $0x528] sm:$0xff]
        %v1007 = vld [vmem:[%s4 + $0x530] sm:$0xff]
        %v1008 = vld [vmem:[%s4 + $0x538] sm:$0xff]
        %v1009 = vld [vmem:[%s4 + $0x540] sm:$0xff]
        %v1010 = vld [vmem:[%s4 + $0x548] sm:$0xff]
        %v1011 = vld [vmem:[%s4 + $0x550] sm:$0xff]
        %v1012 = vld [vmem:[%s4 + $0x558] sm:$0xff]
        %v1013 = vld [vmem:[%s4 + $0x560] sm:$0xff]
        %v1014 = vld [vmem:[%s4 + $0x568] sm:$0xff]
        %v1015 = vld [vmem:[%s4 + $0x570] sm:$0xff]
        %v1016 = vld [vmem:[%s4 + $0x578] sm:$0xff]
        %v1017 = vld [vmem:[%s4 + $0x580] sm:$0xff]
        %v1018 = vld [vmem:[%s4 + $0x588] sm:$0xff]
        %v1019 = vld [vmem:[%s4 + $0x590] sm:$0xff]
        %v1020 = vld [vmem:[%s4 + $0x598] sm:$0xff]
        %v1021 = vld [vmem:[%s4 + $0x5a0] sm:$0xff]
        %v1022 = vld [vmem:[%s4 + $0x5a8] sm:$0xff]
        %v1023 = vld [vmem:[%s4 + $0x5b0] sm:$0xff]
        %v1024 = vld [vmem:[%s4 + $0x5b8] sm:$0xff]
        %v1025 = vld [vmem:[%s4 + $0x5c0] sm:$0xff]
        %v1026 = vld [vmem:[%s4 + $0x5c8] sm:$0xff]
        %v1027 = vld [vmem:[%s4 + $0x5d0] sm:$0xff]
        %v1028 = vld [vmem:[%s4 + $0x5d8] sm:$0xff]
        %v1029 = vld [vmem:[%s4 + $0x5e0] sm:$0xff]
        %v1030 = vld [vmem:[%s4 + $0x5e8] sm:$0xff]
        %v1031 = vld [vmem:[%s4 + $0x5f0] sm:$0xff]
        %v1032 = vld [vmem:[%s4 + $0x5f8] sm:$0xff]
        %v1033 = vld [vmem:[%s4 + $0x600] sm:$0xff]
        %v1034 = vld [vmem:[%s4 + $0x608] sm:$0xff]
        %v1035 = vld [vmem:[%s4 + $0x610] sm:$0xff]
        %v1036 = vld [vmem:[%s4 + $0x618] sm:$0xff]
        %v1037 = vld [vmem:[%s4 + $0x620] sm:$0xff]
        %v1038 = vld [vmem:[%s4 + $0x628] sm:$0xff]
        %v1039 = vld [vmem:[%s4 + $0x630] sm:$0xff]
        %v1040 = vld [vmem:[%s4 + $0x638] sm:$0xff]
        %v1041 = vld [vmem:[%s4 + $0x640] sm:$0xff]
        %v1042 = vld [vmem:[%s4 + $0x648] sm:$0xff]
        %v1043 = vld [vmem:[%s4 + $0x650] sm:$0xff]
        %v1044 = vld [vmem:[%s4 + $0x658] sm:$0xff]
        %v1045 = vld [vmem:[%s4 + $0x660] sm:$0xff]
        %v1046 = vld [vmem:[%s4 + $0x668] sm:$0xff]
        %v1047 = vld [vmem:[%s4 + $0x670] sm:$0xff]
        %v1048 = vld [vmem:[%s4 + $0x678] sm:$0xff]
        %v1049 = vld [vmem:[%s4 + $0x680] sm:$0xff]
        %v1050 = vld [vmem:[%s4 + $0x688] sm:$0xff]
        %v1051 = vld [vmem:[%s4 + $0x690] sm:$0xff]
        %v1052 = vld [vmem:[%s4 + $0x698] sm:$0xff]
        %v1053 = vld [vmem:[%s4 + $0x6a0] sm:$0xff]
        %v1054 = vld [vmem:[%s4 + $0x6a8] sm:$0xff]
        %v1055 = vld [vmem:[%s4 + $0x6b0] sm:$0xff]
        %v1056 = vld [vmem:[%s4 + $0x6b8] sm:$0xff]
        %v1057 = vld [vmem:[%s4 + $0x6c0] sm:$0xff]
        %v1058 = vld [vmem:[%s4 + $0x6c8] sm:$0xff]
        %v1059 = vld [vmem:[%s4 + $0x6d0] sm:$0xff]
        %v1060 = vld [vmem:[%s4 + $0x6d8] sm:$0xff]
        %v1061 = vld [vmem:[%s4 + $0x6e0] sm:$0xff]
        %v1062 = vld [vmem:[%s4 + $0x6e8] sm:$0xff]
        %v1063 = vld [vmem:[%s4 + $0x6f0] sm:$0xff]
        %v1064 = vld [vmem:[%s4 + $0x6f8] sm:$0xff]
        %v1065 = vld [vmem:[%s4 + $0x700] sm:$0xff]
        %v1066 = vld [vmem:[%s4 + $0x708] sm:$0xff]
        %v1067 = vld [vmem:[%s4 + $0x710] sm:$0xff]
        %v1068 = vld [vmem:[%s4 + $0x718] sm:$0xff]
        %v1069 = vld [vmem:[%s4 + $0x720] sm:$0xff]
        %v1070 = vld [vmem:[%s4 + $0x728] sm:$0xff]
        %v1071 = vld [vmem:[%s4 + $0x730] sm:$0xff]
        %v1072 = vld [vmem:[%s4 + $0x738] sm:$0xff]
        %v1073 = vld [vmem:[%s4 + $0x740] sm:$0xff]
        %v1074 = vld [vmem:[%s4 + $0x748] sm:$0xff]
        %v1075 = vld [vmem:[%s4 + $0x750] sm:$0xff]
        %v1076 = vld [vmem:[%s4 + $0x758] sm:$0xff]
        %v1077 = vld [vmem:[%s4 + $0x760] sm:$0xff]
        %v1078 = vld [vmem:[%s4 + $0x768] sm:$0xff]
        %v1079 = vld [vmem:[%s4 + $0x770] sm:$0xff]
        %v1080 = vld [vmem:[%s4 + $0x778] sm:$0xff]
        %v1081 = vld [vmem:[%s4 + $0x780] sm:$0xff]
        %v1082 = vld [vmem:[%s4 + $0x788] sm:$0xff]
        %v1083 = vld [vmem:[%s4 + $0x790] sm:$0xff]
        %v1084 = vld [vmem:[%s4 + $0x798] sm:$0xff]
        %v1085 = vld [vmem:[%s4 + $0x7a0] sm:$0xff]
        %v1086 = vld [vmem:[%s4 + $0x7a8] sm:$0xff]
        %v1087 = vld [vmem:[%s4 + $0x7b0] sm:$0xff]
        %v1088 = vld [vmem:[%s4 + $0x7b8] sm:$0xff]
        %v1089 = vld [vmem:[%s4 + $0x7c0] sm:$0xff]
        %v1090 = vld [vmem:[%s4 + $0x7c8] sm:$0xff]
        %v1091 = vld [vmem:[%s4 + $0x7d0] sm:$0xff]
        %v1092 = vld [vmem:[%s4 + $0x7d8] sm:$0xff]
        %v1093 = vld [vmem:[%s4 + $0x7e0] sm:$0xff]
        %v1094 = vld [vmem:[%s4 + $0x7e8] sm:$0xff]
        %v1095 = vld [vmem:[%s4 + $0x7f0] sm:$0xff]
        %v1096 = vld [vmem:[%s4 + $0x7f8] sm:$0xff]
        %v1097 = vld [vmem:[%s5] sm:$0x1]
        %1098 = vmatpush.msra.mxu0 %v856
        %1099 = vmatpush.msra.mxu0 %v855
        %1100 = vmatpush.msra.mxu0 %v854
        %1101 = vmatpush.msra.mxu0 %v853
        %1102 = vmatpush.msra.mxu0 %v852
        %1103 = vmatpush.msra.mxu0 %v851
        %1104 = vmatpush.msra.mxu0 %v850
        %1105 = vmatpush.msra.mxu0 %v849
        %1106 = vmatpush.msra.mxu0 %v848
        %1107 = vmatpush.msra.mxu0 %v847
        %1108 = vmatpush.msra.mxu0 %v846
        %1109 = vmatpush.msra.mxu0 %v845
        %1110 = vmatpush.msra.mxu0 %v844
        %1111 = vmatpush.msra.mxu0 %v843
        %1112 = vmatpush.msra.mxu0 %v842
        %1113 = vmatpush.msra.mxu0 %v841
        %1114 = vmatmul.f32.gmra.mxu0 %v809
        %v1115 = vpop.f32.mrf.mxu0
        %v1116 = vadd.f32 %v1097, %v1115
        %1117 = vdwg.mxu0
        %1118 = vmatpush.msra.mxu0 %v872
        %1119 = vmatpush.msra.mxu0 %v871
        %1120 = vmatpush.msra.mxu0 %v870
        %1121 = vmatpush.msra.mxu0 %v869
        %1122 = vmatpush.msra.mxu0 %v868
        %1123 = vmatpush.msra.mxu0 %v867
        %1124 = vmatpush.msra.mxu0 %v866
        %1125 = vmatpush.msra.mxu0 %v865
        %1126 = vmatpush.msra.mxu0 %v864
        %1127 = vmatpush.msra.mxu0 %v863
        %1128 = vmatpush.msra.mxu0 %v862
        %1129 = vmatpush.msra.mxu0 %v861
        %1130 = vmatpush.msra.mxu0 %v860
        %1131 = vmatpush.msra.mxu0 %v859
        %1132 = vmatpush.msra.mxu0 %v858
        %1133 = vmatpush.msra.mxu0 %v857
        %1134 = vmatmul.f32.gmra.mxu0 %v810
        %v1135 = vpop.f32.mrf.mxu0
        %v1136 = vadd.f32 %v1116, %v1135
        %1137 = vdwg.mxu0
        %1138 = vmatpush.msra.mxu0 %v888
        %1139 = vmatpush.msra.mxu0 %v887
        %1140 = vmatpush.msra.mxu0 %v886
        %1141 = vmatpush.msra.mxu0 %v885
        %1142 = vmatpush.msra.mxu0 %v884
        %1143 = vmatpush.msra.mxu0 %v883
        %1144 = vmatpush.msra.mxu0 %v882
        %1145 = vmatpush.msra.mxu0 %v881
        %1146 = vmatpush.msra.mxu0 %v880
        %1147 = vmatpush.msra.mxu0 %v879
        %1148 = vmatpush.msra.mxu0 %v878
        %1149 = vmatpush.msra.mxu0 %v877
        %1150 = vmatpush.msra.mxu0 %v876
        %1151 = vmatpush.msra.mxu0 %v875
        %1152 = vmatpush.msra.mxu0 %v874
        %1153 = vmatpush.msra.mxu0 %v873
        %1154 = vmatmul.f32.gmra.mxu0 %v813
        %v1155 = vpop.f32.mrf.mxu0
        %v1156 = vadd.f32 %v1136, %v1155
        %1157 = vdwg.mxu0
        %1158 = vmatpush.msra.mxu0 %v904
        %1159 = vmatpush.msra.mxu0 %v903
        %1160 = vmatpush.msra.mxu0 %v902
        %1161 = vmatpush.msra.mxu0 %v901
        %1162 = vmatpush.msra.mxu0 %v900
        %1163 = vmatpush.msra.mxu0 %v899
        %1164 = vmatpush.msra.mxu0 %v898
        %1165 = vmatpush.msra.mxu0 %v897
        %1166 = vmatpush.msra.mxu0 %v896
        %1167 = vmatpush.msra.mxu0 %v895
        %1168 = vmatpush.msra.mxu0 %v894
        %1169 = vmatpush.msra.mxu0 %v893
        %1170 = vmatpush.msra.mxu0 %v892
        %1171 = vmatpush.msra.mxu0 %v891
        %1172 = vmatpush.msra.mxu0 %v890
        %1173 = vmatpush.msra.mxu0 %v889
        %1174 = vmatmul.f32.gmra.mxu0 %v814
        %v1175 = vpop.f32.mrf.mxu0
        %v1176 = vadd.f32 %v1156, %v1175
        %1177 = vdwg.mxu0
        %1178 = vmatpush.msra.mxu0 %v920
        %1179 = vmatpush.msra.mxu0 %v919
        %1180 = vmatpush.msra.mxu0 %v918
        %1181 = vmatpush.msra.mxu0 %v917
        %1182 = vmatpush.msra.mxu0 %v916
        %1183 = vmatpush.msra.mxu0 %v915
        %1184 = vmatpush.msra.mxu0 %v914
        %1185 = vmatpush.msra.mxu0 %v913
        %1186 = vmatpush.msra.mxu0 %v912
        %1187 = vmatpush.msra.mxu0 %v911
        %1188 = vmatpush.msra.mxu0 %v910
        %1189 = vmatpush.msra.mxu0 %v909
        %1190 = vmatpush.msra.mxu0 %v908
        %1191 = vmatpush.msra.mxu0 %v907
        %1192 = vmatpush.msra.mxu0 %v906
        %1193 = vmatpush.msra.mxu0 %v905
        %1194 = vmatmul.f32.gmra.mxu0 %v817
        %v1195 = vpop.f32.mrf.mxu0
        %v1196 = vadd.f32 %v1176, %v1195
        %1197 = vdwg.mxu0
        %1198 = vmatpush.msra.mxu0 %v936
        %1199 = vmatpush.msra.mxu0 %v935
        %1200 = vmatpush.msra.mxu0 %v934
        %1201 = vmatpush.msra.mxu0 %v933
        %1202 = vmatpush.msra.mxu0 %v932
        %1203 = vmatpush.msra.mxu0 %v931
        %1204 = vmatpush.msra.mxu0 %v930
        %1205 = vmatpush.msra.mxu0 %v929
        %1206 = vmatpush.msra.mxu0 %v928
        %1207 = vmatpush.msra.mxu0 %v927
        %1208 = vmatpush.msra.mxu0 %v926
        %1209 = vmatpush.msra.mxu0 %v925
        %1210 = vmatpush.msra.mxu0 %v924
        %1211 = vmatpush.msra.mxu0 %v923
        %1212 = vmatpush.msra.mxu0 %v922
        %1213 = vmatpush.msra.mxu0 %v921
        %1214 = vmatmul.f32.gmra.mxu0 %v818
        %v1215 = vpop.f32.mrf.mxu0
        %v1216 = vadd.f32 %v1196, %v1215
        %1217 = vdwg.mxu0
        %1218 = vmatpush.msra.mxu0 %v952
        %1219 = vmatpush.msra.mxu0 %v951
        %1220 = vmatpush.msra.mxu0 %v950
        %1221 = vmatpush.msra.mxu0 %v949
        %1222 = vmatpush.msra.mxu0 %v948
        %1223 = vmatpush.msra.mxu0 %v947
        %1224 = vmatpush.msra.mxu0 %v946
        %1225 = vmatpush.msra.mxu0 %v945
        %1226 = vmatpush.msra.mxu0 %v944
        %1227 = vmatpush.msra.mxu0 %v943
        %1228 = vmatpush.msra.mxu0 %v942
        %1229 = vmatpush.msra.mxu0 %v941
        %1230 = vmatpush.msra.mxu0 %v940
        %1231 = vmatpush.msra.mxu0 %v939
        %1232 = vmatpush.msra.mxu0 %v938
        %1233 = vmatpush.msra.mxu0 %v937
        %1234 = vmatmul.f32.gmra.mxu0 %v821
        %v1235 = vpop.f32.mrf.mxu0
        %v1236 = vadd.f32 %v1216, %v1235
        %1237 = vdwg.mxu0
        %1238 = vmatpush.msra.mxu0 %v968
        %1239 = vmatpush.msra.mxu0 %v967
        %1240 = vmatpush.msra.mxu0 %v966
        %1241 = vmatpush.msra.mxu0 %v965
        %1242 = vmatpush.msra.mxu0 %v964
        %1243 = vmatpush.msra.mxu0 %v963
        %1244 = vmatpush.msra.mxu0 %v962
        %1245 = vmatpush.msra.mxu0 %v961
        %1246 = vmatpush.msra.mxu0 %v960
        %1247 = vmatpush.msra.mxu0 %v959
        %1248 = vmatpush.msra.mxu0 %v958
        %1249 = vmatpush.msra.mxu0 %v957
        %1250 = vmatpush.msra.mxu0 %v956
        %1251 = vmatpush.msra.mxu0 %v955
        %1252 = vmatpush.msra.mxu0 %v954
        %1253 = vmatpush.msra.mxu0 %v953
        %1254 = vmatmul.f32.gmra.mxu0 %v822
        %v1255 = vpop.f32.mrf.mxu0
        %v1256 = vadd.f32 %v1236, %v1255
        %1257 = vdwg.mxu0
        %1258 = vmatpush.msra.mxu0 %v984
        %1259 = vmatpush.msra.mxu0 %v983
        %1260 = vmatpush.msra.mxu0 %v982
        %1261 = vmatpush.msra.mxu0 %v981
        %1262 = vmatpush.msra.mxu0 %v980
        %1263 = vmatpush.msra.mxu0 %v979
        %1264 = vmatpush.msra.mxu0 %v978
        %1265 = vmatpush.msra.mxu0 %v977
        %1266 = vmatpush.msra.mxu0 %v976
        %1267 = vmatpush.msra.mxu0 %v975
        %1268 = vmatpush.msra.mxu0 %v974
        %1269 = vmatpush.msra.mxu0 %v973
        %1270 = vmatpush.msra.mxu0 %v972
        %1271 = vmatpush.msra.mxu0 %v971
        %1272 = vmatpush.msra.mxu0 %v970
        %1273 = vmatpush.msra.mxu0 %v969
        %1274 = vmatmul.f32.gmra.mxu0 %v825
        %v1275 = vpop.f32.mrf.mxu0
        %v1276 = vadd.f32 %v1256, %v1275
        %1277 = vdwg.mxu0
        %1278 = vmatpush.msra.mxu0 %v1000
        %1279 = vmatpush.msra.mxu0 %v999
        %1280 = vmatpush.msra.mxu0 %v998
        %1281 = vmatpush.msra.mxu0 %v997
        %1282 = vmatpush.msra.mxu0 %v996
        %1283 = vmatpush.msra.mxu0 %v995
        %1284 = vmatpush.msra.mxu0 %v994
        %1285 = vmatpush.msra.mxu0 %v993
        %1286 = vmatpush.msra.mxu0 %v992
        %1287 = vmatpush.msra.mxu0 %v991
        %1288 = vmatpush.msra.mxu0 %v990
        %1289 = vmatpush.msra.mxu0 %v989
        %1290 = vmatpush.msra.mxu0 %v988
        %1291 = vmatpush.msra.mxu0 %v987
        %1292 = vmatpush.msra.mxu0 %v986
        %1293 = vmatpush.msra.mxu0 %v985
        %1294 = vmatmul.f32.gmra.mxu0 %v826
        %v1295 = vpop.f32.mrf.mxu0
        %v1296 = vadd.f32 %v1276, %v1295
        %1297 = vdwg.mxu0
        %1298 = vmatpush.msra.mxu0 %v1016
        %1299 = vmatpush.msra.mxu0 %v1015
        %1300 = vmatpush.msra.mxu0 %v1014
        %1301 = vmatpush.msra.mxu0 %v1013
        %1302 = vmatpush.msra.mxu0 %v1012
        %1303 = vmatpush.msra.mxu0 %v1011
        %1304 = vmatpush.msra.mxu0 %v1010
        %1305 = vmatpush.msra.mxu0 %v1009
        %1306 = vmatpush.msra.mxu0 %v1008
        %1307 = vmatpush.msra.mxu0 %v1007
        %1308 = vmatpush.msra.mxu0 %v1006
        %1309 = vmatpush.msra.mxu0 %v1005
        %1310 = vmatpush.msra.mxu0 %v1004
        %1311 = vmatpush.msra.mxu0 %v1003
        %1312 = vmatpush.msra.mxu0 %v1002
        %1313 = vmatpush.msra.mxu0 %v1001
        %1314 = vmatmul.f32.gmra.mxu0 %v829
        %v1315 = vpop.f32.mrf.mxu0
        %v1316 = vadd.f32 %v1296, %v1315
        %1317 = vdwg.mxu0
        %1318 = vmatpush.msra.mxu0 %v1032
        %1319 = vmatpush.msra.mxu0 %v1031
        %1320 = vmatpush.msra.mxu0 %v1030
        %1321 = vmatpush.msra.mxu0 %v1029
        %1322 = vmatpush.msra.mxu0 %v1028
        %1323 = vmatpush.msra.mxu0 %v1027
        %1324 = vmatpush.msra.mxu0 %v1026
        %1325 = vmatpush.msra.mxu0 %v1025
        %1326 = vmatpush.msra.mxu0 %v1024
        %1327 = vmatpush.msra.mxu0 %v1023
        %1328 = vmatpush.msra.mxu0 %v1022
        %1329 = vmatpush.msra.mxu0 %v1021
        %1330 = vmatpush.msra.mxu0 %v1020
        %1331 = vmatpush.msra.mxu0 %v1019
        %1332 = vmatpush.msra.mxu0 %v1018
        %1333 = vmatpush.msra.mxu0 %v1017
        %1334 = vmatmul.f32.gmra.mxu0 %v830
        %v1335 = vpop.f32.mrf.mxu0
        %v1336 = vadd.f32 %v1316, %v1335
        %1337 = vdwg.mxu0
        %1338 = vmatpush.msra.mxu0 %v1048
        %1339 = vmatpush.msra.mxu0 %v1047
        %1340 = vmatpush.msra.mxu0 %v1046
        %1341 = vmatpush.msra.mxu0 %v1045
        %1342 = vmatpush.msra.mxu0 %v1044
        %1343 = vmatpush.msra.mxu0 %v1043
        %1344 = vmatpush.msra.mxu0 %v1042
        %1345 = vmatpush.msra.mxu0 %v1041
        %1346 = vmatpush.msra.mxu0 %v1040
        %1347 = vmatpush.msra.mxu0 %v1039
        %1348 = vmatpush.msra.mxu0 %v1038
        %1349 = vmatpush.msra.mxu0 %v1037
        %1350 = vmatpush.msra.mxu0 %v1036
        %1351 = vmatpush.msra.mxu0 %v1035
        %1352 = vmatpush.msra.mxu0 %v1034
        %1353 = vmatpush.msra.mxu0 %v1033
        %1354 = vmatmul.f32.gmra.mxu0 %v833
        %v1355 = vpop.f32.mrf.mxu0
        %v1356 = vadd.f32 %v1336, %v1355
        %1357 = vdwg.mxu0
        %1358 = vmatpush.msra.mxu0 %v1064
        %1359 = vmatpush.msra.mxu0 %v1063
        %1360 = vmatpush.msra.mxu0 %v1062
        %1361 = vmatpush.msra.mxu0 %v1061
        %1362 = vmatpush.msra.mxu0 %v1060
        %1363 = vmatpush.msra.mxu0 %v1059
        %1364 = vmatpush.msra.mxu0 %v1058
        %1365 = vmatpush.msra.mxu0 %v1057
        %1366 = vmatpush.msra.mxu0 %v1056
        %1367 = vmatpush.msra.mxu0 %v1055
        %1368 = vmatpush.msra.mxu0 %v1054
        %1369 = vmatpush.msra.mxu0 %v1053
        %1370 = vmatpush.msra.mxu0 %v1052
        %1371 = vmatpush.msra.mxu0 %v1051
        %1372 = vmatpush.msra.mxu0 %v1050
        %1373 = vmatpush.msra.mxu0 %v1049
        %1374 = vmatmul.f32.gmra.mxu0 %v834
        %v1375 = vpop.f32.mrf.mxu0
        %v1376 = vadd.f32 %v1356, %v1375
        %1377 = vdwg.mxu0
        %1378 = vmatpush.msra.mxu0 %v1080
        %1379 = vmatpush.msra.mxu0 %v1079
        %1380 = vmatpush.msra.mxu0 %v1078
        %1381 = vmatpush.msra.mxu0 %v1077
        %1382 = vmatpush.msra.mxu0 %v1076
        %1383 = vmatpush.msra.mxu0 %v1075
        %1384 = vmatpush.msra.mxu0 %v1074
        %1385 = vmatpush.msra.mxu0 %v1073
        %1386 = vmatpush.msra.mxu0 %v1072
        %1387 = vmatpush.msra.mxu0 %v1071
        %1388 = vmatpush.msra.mxu0 %v1070
        %1389 = vmatpush.msra.mxu0 %v1069
        %1390 = vmatpush.msra.mxu0 %v1068
        %1391 = vmatpush.msra.mxu0 %v1067
        %1392 = vmatpush.msra.mxu0 %v1066
        %1393 = vmatpush.msra.mxu0 %v1065
        %1394 = vmatmul.f32.gmra.mxu0 %v837
        %v1395 = vpop.f32.mrf.mxu0
        %v1396 = vadd.f32 %v1376, %v1395
        %1397 = vdwg.mxu0
        %1398 = vmatpush.msra.mxu0 %v1096
        %1399 = vmatpush.msra.mxu0 %v1095
        %1400 = vmatpush.msra.mxu0 %v1094
        %1401 = vmatpush.msra.mxu0 %v1093
        %1402 = vmatpush.msra.mxu0 %v1092
        %1403 = vmatpush.msra.mxu0 %v1091
        %1404 = vmatpush.msra.mxu0 %v1090
        %1405 = vmatpush.msra.mxu0 %v1089
        %1406 = vmatpush.msra.mxu0 %v1088
        %1407 = vmatpush.msra.mxu0 %v1087
        %1408 = vmatpush.msra.mxu0 %v1086
        %1409 = vmatpush.msra.mxu0 %v1085
        %1410 = vmatpush.msra.mxu0 %v1084
        %1411 = vmatpush.msra.mxu0 %v1083
        %1412 = vmatpush.msra.mxu0 %v1082
        %1413 = vmatpush.msra.mxu0 %v1081
        %1414 = vmatmul.f32.gmra.mxu0 %v838
        %v1415 = vpop.f32.mrf.mxu0
        %v1416 = vadd.f32 %v1396, %v1415
        %1417 = vdwg.mxu0
        %vm1418 = vcmask 253952
        %1419 = vst.msk [vmem:[%s279] sm:$0x1] %vm1418, %v1416
        %s1420 = smul.u32 2, %s22
        %p1421 = scmp.lt.s32.totalorder %s1420, 3
        %s1422 = scalar_select %p1421, %s1420, 3
        %s1423 = smul.addr %s1422, 8
        %s1424 = scalar_lea.vmem %s6, %s1423
        %s1425 = sand.u32 %s187, 1
        %s1426 = scalar_lea.sflag [#allocation3], %s1425
        %s1427 = sand.u32 %s187, 1
        %s1428 = scalar_lea.vmem [#allocation2], %s1427
        // Predicated region
        $region45: #{_lambda_.1} parent=43 // pred_check
          %p1429 = pneg %p171
        $region46: #{_lambda_.1} parent=43 // pred_check_branch
          %1431 = sbr.rel (%p1429) target = $region48
        $region47: #{_lambda_.1} parent=43 // pred_region
          %s1432 = smul.u32 2, %s22
        $region48: #{_lambda_.1} parent=43 // pred_fallthru
          _
        // Predicated region
        $region49: #{_lambda_.1} parent=43 // pred_check
          %p1433 = pneg %p197
        $region50: #{_lambda_.1} parent=43 // pred_check_branch
          %1435 = sbr.rel (%p1433) target = $region52
        $region51: #{_lambda_.1} parent=43 // pred_region
          %1437 = vsyncadd %s1426, 0
          %s1438 = scalar_lea.hbm %s7, %s22
          %s1440 = sshll.u32 %s1428, 4
          %s1441 = int_to_ptr.vmem [resolvable:$true] %s1440
          %s1442 = sshll.u32 %s1438, 4
          %s1443 = int_to_ptr.hbm [resolvable:$true] %s1442
          %1445 = dma.vmem_to_hbm [thread:$0]  %s1441, 16, %s1443, %s1426
        $region52: #{_lambda_.1} parent=43 // pred_fallthru
          _
      $region44: #{_lambda_.1} parent=5 // pred_fallthru
        _
      %p1446 = scmp.le.s32.totalorder 2, %s17
      // Predicated region
      $region53: #{_lambda_.1} parent=5 // pred_check
        %p1447 = pneg %p1446
      $region54: #{_lambda_.1} parent=5 // pred_check_branch
        %1449 = sbr.rel (%p1447) target = $region56
      $region55: #{_lambda_.1} parent=5 // pred_region
        %s1450 = ssub.s32 %s17, 2
        // Predicated region
        $region57: #{_lambda_.1} parent=55 // pred_check
          %p1451 = pneg %p177
        $region58: #{_lambda_.1} parent=55 // pred_check_branch
          %1453 = sbr.rel (%p1451) target = $region60
        $region59: #{_lambda_.1} parent=55 // pred_region
          %s1454 = smul.u32 2, %s23
          %p1455 = scmp.lt.s32.totalorder %s1454, 3
          %s1456 = scalar_select %p1455, %s1454, 3
          %s1457 = smul.addr %s1456, 8
          %s1458 = scalar_lea.vmem %s6, %s1457
        $region60: #{_lambda_.1} parent=55 // pred_fallthru
          _
        // Predicated region
        $region61: #{_lambda_.1} parent=55 // pred_check
          %p1459 = pneg %p203
        $region62: #{_lambda_.1} parent=55 // pred_check_branch
          %1461 = sbr.rel (%p1459) target = $region64
        $region63: #{_lambda_.1} parent=55 // pred_region
          %s1462 = sand.u32 %s188, 1
          %s1463 = scalar_lea.sflag [#allocation3], %s1462
          %s1464 = sand.u32 %s188, 1
          %s1465 = scalar_lea.vmem [#allocation2], %s1464
          %1467 = dma.done %s1463, 16
        $region64: #{_lambda_.1} parent=55 // pred_fallthru
          _
      $region56: #{_lambda_.1} parent=5 // pred_fallthru
        _
    $region6: #{_lambda_.1} parent=1 // loop_footer
      %s21 = sadd.s32 1, %s17
    $region7: #{_lambda_.1} parent=1 // loop_footer_branch
      %16 = sbr.rel target = $region3
    $region8: #{_lambda_.1} parent=1 // loop_exit
      _
    %1468 = vsyncpa [#allocation3], 1
    %s1469 = scalar_lea.sflag [#allocation3], 1
    %1470 = vsyncpa %s1469, 1

</llo_original>
